<compile_context>
chip_gen: v7x
topology: tpu7x:2x2x1
jax: 0.10.0
libtpu: 0.0.40
codegen_flags: <defaults>
</compile_context>

<pallas_src>
import functools

import jax
import jax.numpy as jnp
from jax.experimental import pallas as pl
from jax.experimental.pallas import tpu as pltpu

_LANE = 128  # MXU / lane alignment


def _round_up(x, m):
    return ((x + m - 1) // m) * m


def _mlp_kernel(x_ref, w1_ref, b1_ref, w2_ref, b2_ref, w3_ref, b3_ref,
                w4_ref, b4_ref, o_ref):
    # All matmul operands are bf16; accumulation is f32; bias + ReLU run in f32 on
    # the VPU, then activations are cast back to bf16 for the next MXU pass.
    h = jnp.dot(x_ref[...], w1_ref[...], preferred_element_type=jnp.float32)
    h = jnp.maximum(h + b1_ref[...], 0.0).astype(jnp.bfloat16)

    h = jnp.dot(h, w2_ref[...], preferred_element_type=jnp.float32)
    h = jnp.maximum(h + b2_ref[...], 0.0).astype(jnp.bfloat16)

    h = jnp.dot(h, w3_ref[...], preferred_element_type=jnp.float32)
    h = jnp.maximum(h + b3_ref[...], 0.0).astype(jnp.bfloat16)

    # fc4: lane-dense (tile, 128) output; real logits live in column 0, the other
    # 127 columns are zero-padded weights/biases (sliced off in the wrapper).
    out = jnp.dot(h, w4_ref[...], preferred_element_type=jnp.float32) + b4_ref[...]
    o_ref[...] = out


@functools.partial(jax.jit, static_argnames=("batch_tile",))
def fc_discriminator_forward(x, params, *, batch_tile=128):
    """x: (B, 1, H, W) or (B, H, W) or (B, D). Returns (B, 1) float32."""
    B = x.shape[0]
    x2d = x.reshape(B, -1)
    D = x2d.shape[1]

    w1, b1, w2, b2, w3, b3, w4, b4 = params

    # --- pad K of fc1 (D) to a lane-aligned multiple of 128 -------------------
    Dp = _round_up(D, _LANE)
    if Dp != D:
        x2d = jnp.pad(x2d, ((0, 0), (0, Dp - D)))
        w1 = jnp.pad(w1, ((0, Dp - D), (0, 0)))  # zero rows contribute nothing

    # --- pad N of fc4 (1) to 128 for a lane-dense output slab -----------------
    n_out = w4.shape[1]
    w4p = jnp.pad(w4, ((0, 0), (0, _LANE - n_out)))
    b4p = jnp.pad(b4, ((0, 0), (0, _LANE - n_out)))

    # --- pad batch to a multiple of the batch tile -----------------------------
    Bp = _round_up(B, batch_tile)
    if Bp != B:
        x2d = jnp.pad(x2d, ((0, Bp - B), (0, 0)))

    # bf16 matmul operands (halved DMA bytes, native MXU path); biases stay f32.
    x_bf = x2d.astype(jnp.bfloat16)
    w1b = w1.astype(jnp.bfloat16)
    w2b = w2.astype(jnp.bfloat16)
    w3b = w3.astype(jnp.bfloat16)
    w4b = w4p.astype(jnp.bfloat16)
    b1f = b1.astype(jnp.float32)
    b2f = b2.astype(jnp.float32)
    b3f = b3.astype(jnp.float32)
    b4f = b4p.astype(jnp.float32)

    def x_map(i):
        return (i, 0)

    def bcast_map(i):
        return (0, 0)

    out = pl.pallas_call(
        _mlp_kernel,
        out_shape=jax.ShapeDtypeStruct((Bp, _LANE), jnp.float32),
        grid=(Bp // batch_tile,),
        in_specs=[
            pl.BlockSpec((batch_tile, Dp), x_map),   # streamed per-tile batch
            pl.BlockSpec(w1b.shape, bcast_map),      # weights/biases resident
            pl.BlockSpec(b1f.shape, bcast_map),
            pl.BlockSpec(w2b.shape, bcast_map),
            pl.BlockSpec(b2f.shape, bcast_map),
            pl.BlockSpec(w3b.shape, bcast_map),
            pl.BlockSpec(b3f.shape, bcast_map),
            pl.BlockSpec(w4b.shape, bcast_map),
            pl.BlockSpec(b4f.shape, bcast_map),
        ],
        out_specs=pl.BlockSpec((batch_tile, _LANE), x_map),
        compiler_params=pltpu.CompilerParams(
            dimension_semantics=("parallel",)),
    )(x_bf, w1b, b1f, w2b, b2f, w3b, b3f, w4b, b4f)

    # Drop padded batch rows and padded output lanes.
    return out[:B, :n_out]


def init_params(key, image_size):
    """Deterministic init matching PyTorch nn.Linear default: U(-1/sqrt(fan_in), ...)."""
    dims = [image_size * image_size, 512, 256, 128, 1]
    params = []
    for i in range(4):
        fan_in, fan_out = dims[i], dims[i + 1]
        key, kw, kb = jax.random.split(key, 3)
        bound = 1.0 / float(fan_in) ** 0.5
        w = jax.random.uniform(kw, (fan_in, fan_out), jnp.float32, -bound, bound)
        b = jax.random.uniform(kb, (1, fan_out), jnp.float32, -bound, bound)
        params += [w, b]
    return params


def _reference_forward(x, params):
    """Plain-JAX f32 reference of the PyTorch forward."""
    B = x.shape[0]
    h = x.reshape(B, -1).astype(jnp.float32)
    w1, b1, w2, b2, w3, b3, w4, b4 = params
    h = jnp.maximum(h @ w1 + b1, 0.0)
    h = jnp.maximum(h @ w2 + b2, 0.0)
    h = jnp.maximum(h @ w3 + b3, 0.0)
    return h @ w4 + b4


if __name__ == "__main__":
    image_size = 16
    batch_size = 2

    key = jax.random.PRNGKey(0)
    k_params, k_x = jax.random.split(key)

    params = init_params(k_params, image_size)
    # NCHW input, just like the PyTorch module would receive.
    x = jax.random.normal(k_x, (batch_size, 1, image_size, image_size), jnp.float32)

    out = fc_discriminator_forward(x, params)
    out = jax.block_until_ready(out)

    ref = _reference_forward(x, params)
    assert out.shape == (batch_size, 1), out.shape

    # bf16 matmul operands with f32 accumulation -> a few-percent relative tolerance
    # vs. the pure-f32 reference.
    max_err = float(jnp.max(jnp.abs(out - ref)))
    scale = float(jnp.max(jnp.abs(ref))) + 1e-6
    assert max_err / scale < 5e-2, (max_err, scale, out, ref)

    print("KERNEL_OK")
</pallas_src>

<mosaic_0001>
module attributes {stable_mosaic.version = 11 : i64} {
  func.func @_mlp_kernel(%arg0: i32, %arg1: memref<128x256xbf16, #tpu.memory_space<vmem>>, %arg2: memref<256x512xbf16, #tpu.memory_space<vmem>>, %arg3: memref<1x512xf32, #tpu.memory_space<vmem>>, %arg4: memref<512x256xbf16, #tpu.memory_space<vmem>>, %arg5: memref<1x256xf32, #tpu.memory_space<vmem>>, %arg6: memref<256x128xbf16, #tpu.memory_space<vmem>>, %arg7: memref<1x128xf32, #tpu.memory_space<vmem>>, %arg8: memref<128x128xbf16, #tpu.memory_space<vmem>>, %arg9: memref<1x128xf32, #tpu.memory_space<vmem>>, %arg10: memref<128x128xf32, #tpu.memory_space<vmem>>) attributes {dimension_semantics = [#tpu.dimension_semantics<parallel>], iteration_bounds = array<i64: 1>, scalar_prefetch = 0 : i64, scratch_operands = 0 : i64, tpu.core_type = #tpu.core_type<tc>, window_params = [{transform_indices = @transform_0, window_bounds = array<i64: 128, 256>}, {pipeline_mode = #tpu.pipeline_mode<synchronous>, transform_indices = @transform_1, window_bounds = array<i64: 256, 512>}, {pipeline_mode = #tpu.pipeline_mode<synchronous>, transform_indices = @transform_2, window_bounds = array<i64: 1, 512>}, {pipeline_mode = #tpu.pipeline_mode<synchronous>, transform_indices = @transform_3, window_bounds = array<i64: 512, 256>}, {pipeline_mode = #tpu.pipeline_mode<synchronous>, transform_indices = @transform_4, window_bounds = array<i64: 1, 256>}, {pipeline_mode = #tpu.pipeline_mode<synchronous>, transform_indices = @transform_5, window_bounds = array<i64: 256, 128>}, {pipeline_mode = #tpu.pipeline_mode<synchronous>, transform_indices = @transform_6, window_bounds = array<i64: 1, 128>}, {pipeline_mode = #tpu.pipeline_mode<synchronous>, transform_indices = @transform_7, window_bounds = array<i64: 128, 128>}, {pipeline_mode = #tpu.pipeline_mode<synchronous>, transform_indices = @transform_8, window_bounds = array<i64: 1, 128>}, {transform_indices = @transform_9, window_bounds = array<i64: 128, 128>}]} {
    %c0 = arith.constant 0 : index
    %c0_0 = arith.constant 0 : index
    %0 = vector.load %arg1[%c0, %c0_0] : memref<128x256xbf16, #tpu.memory_space<vmem>>, vector<128x256xbf16>
    %c0_1 = arith.constant 0 : index
    %c0_2 = arith.constant 0 : index
    %1 = vector.load %arg2[%c0_1, %c0_2] : memref<256x512xbf16, #tpu.memory_space<vmem>>, vector<256x512xbf16>
    %cst = arith.constant dense<0.000000e+00> : vector<128x512xf32>
    %2 = tpu.matmul %0, %1, %cst {dimension_numbers = #tpu.dot_dimension_numbers<[1], [0], [0], [1], [0, 0, 1, 1], [], []>} : vector<128x256xbf16>, vector<256x512xbf16>, vector<128x512xf32> -> vector<128x512xf32>
    %c0_3 = arith.constant 0 : index
    %c0_4 = arith.constant 0 : index
    %3 = vector.load %arg3[%c0_3, %c0_4] : memref<1x512xf32, #tpu.memory_space<vmem>>, vector<1x512xf32>
    %4 = vector.broadcast %3 : vector<1x512xf32> to vector<128x512xf32>
    %5 = arith.addf %2, %4 : vector<128x512xf32>
    %cst_5 = arith.constant 0.000000e+00 : f32
    %6 = vector.broadcast %cst_5 : f32 to vector<128x512xf32>
    %7 = arith.maximumf %5, %6 : vector<128x512xf32>
    %8 = arith.truncf %7 : vector<128x512xf32> to vector<128x512xbf16>
    %c0_6 = arith.constant 0 : index
    %c0_7 = arith.constant 0 : index
    %9 = vector.load %arg4[%c0_6, %c0_7] : memref<512x256xbf16, #tpu.memory_space<vmem>>, vector<512x256xbf16>
    %cst_8 = arith.constant dense<0.000000e+00> : vector<128x256xf32>
    %10 = tpu.matmul %8, %9, %cst_8 {dimension_numbers = #tpu.dot_dimension_numbers<[1], [0], [0], [1], [0, 0, 1, 1], [], []>} : vector<128x512xbf16>, vector<512x256xbf16>, vector<128x256xf32> -> vector<128x256xf32>
    %c0_9 = arith.constant 0 : index
    %c0_10 = arith.constant 0 : index
    %11 = vector.load %arg5[%c0_9, %c0_10] : memref<1x256xf32, #tpu.memory_space<vmem>>, vector<1x256xf32>
    %12 = vector.broadcast %11 : vector<1x256xf32> to vector<128x256xf32>
    %13 = arith.addf %10, %12 : vector<128x256xf32>
    %cst_11 = arith.constant 0.000000e+00 : f32
    %14 = vector.broadcast %cst_11 : f32 to vector<128x256xf32>
    %15 = arith.maximumf %13, %14 : vector<128x256xf32>
    %16 = arith.truncf %15 : vector<128x256xf32> to vector<128x256xbf16>
    %c0_12 = arith.constant 0 : index
    %c0_13 = arith.constant 0 : index
    %17 = vector.load %arg6[%c0_12, %c0_13] : memref<256x128xbf16, #tpu.memory_space<vmem>>, vector<256x128xbf16>
    %cst_14 = arith.constant dense<0.000000e+00> : vector<128x128xf32>
    %18 = tpu.matmul %16, %17, %cst_14 {dimension_numbers = #tpu.dot_dimension_numbers<[1], [0], [0], [1], [0, 0, 1, 1], [], []>} : vector<128x256xbf16>, vector<256x128xbf16>, vector<128x128xf32> -> vector<128x128xf32>
    %c0_15 = arith.constant 0 : index
    %c0_16 = arith.constant 0 : index
    %19 = vector.load %arg7[%c0_15, %c0_16] : memref<1x128xf32, #tpu.memory_space<vmem>>, vector<1x128xf32>
    %20 = vector.broadcast %19 : vector<1x128xf32> to vector<128x128xf32>
    %21 = arith.addf %18, %20 : vector<128x128xf32>
    %cst_17 = arith.constant 0.000000e+00 : f32
    %22 = vector.broadcast %cst_17 : f32 to vector<128x128xf32>
    %23 = arith.maximumf %21, %22 : vector<128x128xf32>
    %24 = arith.truncf %23 : vector<128x128xf32> to vector<128x128xbf16>
    %c0_18 = arith.constant 0 : index
    %c0_19 = arith.constant 0 : index
    %25 = vector.load %arg8[%c0_18, %c0_19] : memref<128x128xbf16, #tpu.memory_space<vmem>>, vector<128x128xbf16>
    %cst_20 = arith.constant dense<0.000000e+00> : vector<128x128xf32>
    %26 = tpu.matmul %24, %25, %cst_20 {dimension_numbers = #tpu.dot_dimension_numbers<[1], [0], [0], [1], [0, 0, 1, 1], [], []>} : vector<128x128xbf16>, vector<128x128xbf16>, vector<128x128xf32> -> vector<128x128xf32>
    %c0_21 = arith.constant 0 : index
    %c0_22 = arith.constant 0 : index
    %27 = vector.load %arg9[%c0_21, %c0_22] : memref<1x128xf32, #tpu.memory_space<vmem>>, vector<1x128xf32>
    %28 = vector.broadcast %27 : vector<1x128xf32> to vector<128x128xf32>
    %29 = arith.addf %26, %28 : vector<128x128xf32>
    %c0_23 = arith.constant 0 : index
    %c0_24 = arith.constant 0 : index
    %30 = vector.load %arg10[%c0_23, %c0_24] : memref<128x128xf32, #tpu.memory_space<vmem>>, vector<128x128xf32>
    tpu.vector_store %arg10[%c0_23, %c0_24], %29 {strides = array<i32>} : memref<128x128xf32, #tpu.memory_space<vmem>>, vector<128x128xf32>,
    return
  }
  func.func @transform_0(%arg0: i32) -> (i32, i32) {
    %c0_i32 = arith.constant 0 : i32
    %c0_i32_0 = arith.constant 0 : i32
    return %arg0, %c0_i32 : i32, i32
  }
  func.func @transform_1(%arg0: i32) -> (i32, i32) {
    %c0_i32 = arith.constant 0 : i32
    %c0_i32_0 = arith.constant 0 : i32
    %c0_i32_1 = arith.constant 0 : i32
    return %c0_i32, %c0_i32_0 : i32, i32
  }
  func.func @transform_2(%arg0: i32) -> (i32, i32) {
    %c0_i32 = arith.constant 0 : i32
    %c0_i32_0 = arith.constant 0 : i32
    %c0_i32_1 = arith.constant 0 : i32
    return %c0_i32, %c0_i32_0 : i32, i32
  }
  func.func @transform_3(%arg0: i32) -> (i32, i32) {
    %c0_i32 = arith.constant 0 : i32
    %c0_i32_0 = arith.constant 0 : i32
    %c0_i32_1 = arith.constant 0 : i32
    return %c0_i32, %c0_i32_0 : i32, i32
  }
  func.func @transform_4(%arg0: i32) -> (i32, i32) {
    %c0_i32 = arith.constant 0 : i32
    %c0_i32_0 = arith.constant 0 : i32
    %c0_i32_1 = arith.constant 0 : i32
    return %c0_i32, %c0_i32_0 : i32, i32
  }
  func.func @transform_5(%arg0: i32) -> (i32, i32) {
    %c0_i32 = arith.constant 0 : i32
    %c0_i32_0 = arith.constant 0 : i32
    %c0_i32_1 = arith.constant 0 : i32
    return %c0_i32, %c0_i32_0 : i32, i32
  }
  func.func @transform_6(%arg0: i32) -> (i32, i32) {
    %c0_i32 = arith.constant 0 : i32
    %c0_i32_0 = arith.constant 0 : i32
    %c0_i32_1 = arith.constant 0 : i32
    return %c0_i32, %c0_i32_0 : i32, i32
  }
  func.func @transform_7(%arg0: i32) -> (i32, i32) {
    %c0_i32 = arith.constant 0 : i32
    %c0_i32_0 = arith.constant 0 : i32
    %c0_i32_1 = arith.constant 0 : i32
    return %c0_i32, %c0_i32_0 : i32, i32
  }
  func.func @transform_8(%arg0: i32) -> (i32, i32) {
    %c0_i32 = arith.constant 0 : i32
    %c0_i32_0 = arith.constant 0 : i32
    %c0_i32_1 = arith.constant 0 : i32
    return %c0_i32, %c0_i32_0 : i32, i32
  }
  func.func @transform_9(%arg0: i32) -> (i32, i32) {
    %c0_i32 = arith.constant 0 : i32
    %c0_i32_0 = arith.constant 0 : i32
    return %arg0, %c0_i32 : i32, i32
  }
}

</mosaic_0001>

<llo_original>
// kernel: fc_discriminator_forward.1
$region0: #{fc_discriminator_forward.1}
  #allocation0 [shape = 'u32[]', space=smem, size = 0x4, offset = 0x4, fixed_abs, tag = 'smem constant byte address 0x4 - core index']
  #allocation1 [shape = 'u32[144,128]{1,0:T(1,128)}', space=vmem, size = 0x12000, scoped, tag = 'internal scratch']
  %s0 = inlined_call_operand.vmem [shape: bf16[128,256], index: 0, kind: input, shape index: {}]
  %s1 = inlined_call_operand.vmem [shape: bf16[256,512], index: 1, kind: input, shape index: {}]
  %s2 = inlined_call_operand.vmem [shape: f32[1,512], index: 2, kind: input, shape index: {}]
  %s3 = inlined_call_operand.vmem [shape: bf16[512,256], index: 3, kind: input, shape index: {}]
  %s4 = inlined_call_operand.vmem [shape: f32[1,256], index: 4, kind: input, shape index: {}]
  %s5 = inlined_call_operand.vmem [shape: bf16[256,128], index: 5, kind: input, shape index: {}]
  %s6 = inlined_call_operand.vmem [shape: f32[1,128], index: 6, kind: input, shape index: {}]
  %s7 = inlined_call_operand.vmem [shape: bf16[128,128], index: 7, kind: input, shape index: {}]
  %s8 = inlined_call_operand.vmem [shape: f32[1,128], index: 8, kind: input, shape index: {}]
  %s9 = inlined_call_operand.vmem [shape: f32[128,128], index: 9, kind: output, shape index: {}]
  %s10 = sld [smem:[#allocation0]]
  $region46: #{fc_discriminator_forward.1} parent=0
    _
  %s12 = ssub.s32 1, %s10
  %s13 = scalar_select 0, %s12, %s10
  // Predicated region
  $region2: #{fc_discriminator_forward.1} parent=0 // pred_check
    _
  $region3: #{fc_discriminator_forward.1} parent=0 // pred_check_branch
    %15 = sbr.rel (0) target = $region5
  $region4: #{fc_discriminator_forward.1} parent=0 // pred_region
    _
  $region5: #{fc_discriminator_forward.1} parent=0 // pred_fallthru
    _
  // Predicated region
  $region6: #{fc_discriminator_forward.1} parent=0 // pred_check
    _
  $region7: #{fc_discriminator_forward.1} parent=0 // pred_check_branch
    %17 = sbr.rel (0) target = $region9
  $region8: #{fc_discriminator_forward.1} parent=0 // pred_region
    _
  $region9: #{fc_discriminator_forward.1} parent=0 // pred_fallthru
    _
  // Predicated region
  $region10: #{fc_discriminator_forward.1} parent=0 // pred_check
    _
  $region11: #{fc_discriminator_forward.1} parent=0 // pred_check_branch
    %19 = sbr.rel (0) target = $region13
  $region12: #{fc_discriminator_forward.1} parent=0 // pred_region
    _
  $region13: #{fc_discriminator_forward.1} parent=0 // pred_fallthru
    _
  // Predicated region
  $region14: #{fc_discriminator_forward.1} parent=0 // pred_check
    _
  $region15: #{fc_discriminator_forward.1} parent=0 // pred_check_branch
    %21 = sbr.rel (0) target = $region17
  $region16: #{fc_discriminator_forward.1} parent=0 // pred_region
    _
  $region17: #{fc_discriminator_forward.1} parent=0 // pred_fallthru
    _
  // Predicated region
  $region18: #{fc_discriminator_forward.1} parent=0 // pred_check
    _
  $region19: #{fc_discriminator_forward.1} parent=0 // pred_check_branch
    %23 = sbr.rel (0) target = $region21
  $region20: #{fc_discriminator_forward.1} parent=0 // pred_region
    _
  $region21: #{fc_discriminator_forward.1} parent=0 // pred_fallthru
    _
  // Predicated region
  $region22: #{fc_discriminator_forward.1} parent=0 // pred_check
    _
  $region23: #{fc_discriminator_forward.1} parent=0 // pred_check_branch
    %25 = sbr.rel (0) target = $region25
  $region24: #{fc_discriminator_forward.1} parent=0 // pred_region
    _
  $region25: #{fc_discriminator_forward.1} parent=0 // pred_fallthru
    _
  // Predicated region
  $region26: #{fc_discriminator_forward.1} parent=0 // pred_check
    _
  $region27: #{fc_discriminator_forward.1} parent=0 // pred_check_branch
    %27 = sbr.rel (0) target = $region29
  $region28: #{fc_discriminator_forward.1} parent=0 // pred_region
    _
  $region29: #{fc_discriminator_forward.1} parent=0 // pred_fallthru
    _
  // Predicated region
  $region30: #{fc_discriminator_forward.1} parent=0 // pred_check
    _
  $region31: #{fc_discriminator_forward.1} parent=0 // pred_check_branch
    %29 = sbr.rel (0) target = $region33
  $region32: #{fc_discriminator_forward.1} parent=0 // pred_region
    _
  $region33: #{fc_discriminator_forward.1} parent=0 // pred_fallthru
    _
  // Predicated region
  $region34: #{fc_discriminator_forward.1} parent=0 // pred_check
    _
  $region35: #{fc_discriminator_forward.1} parent=0 // pred_check_branch
    %31 = sbr.rel (0) target = $region37
  $region36: #{fc_discriminator_forward.1} parent=0 // pred_region
    _
  $region37: #{fc_discriminator_forward.1} parent=0 // pred_fallthru
    _
  %v33 = vld [vmem:[%s0] sm:$0xff]
  %v34 = vld [vmem:[%s0 + $0x8] sm:$0xff]
  %v35 = vld [vmem:[%s0 + $0x10] sm:$0xff]
  %v36 = vld [vmem:[%s0 + $0x18] sm:$0xff]
  %v37 = vld [vmem:[%s0 + $0x20] sm:$0xff]
  %v38 = vld [vmem:[%s0 + $0x28] sm:$0xff]
  %v39 = vld [vmem:[%s0 + $0x30] sm:$0xff]
  %v40 = vld [vmem:[%s0 + $0x38] sm:$0xff]
  %v41 = vld [vmem:[%s0 + $0x40] sm:$0xff]
  %v42 = vld [vmem:[%s0 + $0x48] sm:$0xff]
  %v43 = vld [vmem:[%s0 + $0x50] sm:$0xff]
  %v44 = vld [vmem:[%s0 + $0x58] sm:$0xff]
  %v45 = vld [vmem:[%s0 + $0x60] sm:$0xff]
  %v46 = vld [vmem:[%s0 + $0x68] sm:$0xff]
  %v47 = vld [vmem:[%s0 + $0x70] sm:$0xff]
  %v48 = vld [vmem:[%s0 + $0x78] sm:$0xff]
  %v49 = vld [vmem:[%s1] sm:$0xff]
  %v50 = vld [vmem:[%s1 + $0x8] sm:$0xff]
  %v51 = vld [vmem:[%s1 + $0x10] sm:$0xff]
  %v52 = vld [vmem:[%s1 + $0x18] sm:$0xff]
  %v53 = vld [vmem:[%s1 + $0x20] sm:$0xff]
  %v54 = vld [vmem:[%s1 + $0x28] sm:$0xff]
  %v55 = vld [vmem:[%s1 + $0x30] sm:$0xff]
  %v56 = vld [vmem:[%s1 + $0x38] sm:$0xff]
  %v57 = vld [vmem:[%s1 + $0x40] sm:$0xff]
  %v58 = vld [vmem:[%s1 + $0x48] sm:$0xff]
  %v59 = vld [vmem:[%s1 + $0x50] sm:$0xff]
  %v60 = vld [vmem:[%s1 + $0x58] sm:$0xff]
  %v61 = vld [vmem:[%s1 + $0x60] sm:$0xff]
  %v62 = vld [vmem:[%s1 + $0x68] sm:$0xff]
  %v63 = vld [vmem:[%s1 + $0x70] sm:$0xff]
  %v64 = vld [vmem:[%s1 + $0x78] sm:$0xff]
  %v65 = vld [vmem:[%s1 + $0x80] sm:$0xff]
  %v66 = vld [vmem:[%s1 + $0x88] sm:$0xff]
  %v67 = vld [vmem:[%s1 + $0x90] sm:$0xff]
  %v68 = vld [vmem:[%s1 + $0x98] sm:$0xff]
  %v69 = vld [vmem:[%s1 + $0xa0] sm:$0xff]
  %v70 = vld [vmem:[%s1 + $0xa8] sm:$0xff]
  %v71 = vld [vmem:[%s1 + $0xb0] sm:$0xff]
  %v72 = vld [vmem:[%s1 + $0xb8] sm:$0xff]
  %v73 = vld [vmem:[%s1 + $0xc0] sm:$0xff]
  %v74 = vld [vmem:[%s1 + $0xc8] sm:$0xff]
  %v75 = vld [vmem:[%s1 + $0xd0] sm:$0xff]
  %v76 = vld [vmem:[%s1 + $0xd8] sm:$0xff]
  %v77 = vld [vmem:[%s1 + $0xe0] sm:$0xff]
  %v78 = vld [vmem:[%s1 + $0xe8] sm:$0xff]
  %v79 = vld [vmem:[%s1 + $0xf0] sm:$0xff]
  %v80 = vld [vmem:[%s1 + $0xf8] sm:$0xff]
  %v81 = vld [vmem:[%s1 + $0x100] sm:$0xff]
  %v82 = vld [vmem:[%s1 + $0x108] sm:$0xff]
  %v83 = vld [vmem:[%s1 + $0x110] sm:$0xff]
  %v84 = vld [vmem:[%s1 + $0x118] sm:$0xff]
  %v85 = vld [vmem:[%s1 + $0x120] sm:$0xff]
  %v86 = vld [vmem:[%s1 + $0x128] sm:$0xff]
  %v87 = vld [vmem:[%s1 + $0x130] sm:$0xff]
  %v88 = vld [vmem:[%s1 + $0x138] sm:$0xff]
  %v89 = vld [vmem:[%s1 + $0x140] sm:$0xff]
  %v90 = vld [vmem:[%s1 + $0x148] sm:$0xff]
  %v91 = vld [vmem:[%s1 + $0x150] sm:$0xff]
  %v92 = vld [vmem:[%s1 + $0x158] sm:$0xff]
  %v93 = vld [vmem:[%s1 + $0x160] sm:$0xff]
  %v94 = vld [vmem:[%s1 + $0x168] sm:$0xff]
  %v95 = vld [vmem:[%s1 + $0x170] sm:$0xff]
  %v96 = vld [vmem:[%s1 + $0x178] sm:$0xff]
  %v97 = vld [vmem:[%s1 + $0x180] sm:$0xff]
  %v98 = vld [vmem:[%s1 + $0x188] sm:$0xff]
  %v99 = vld [vmem:[%s1 + $0x190] sm:$0xff]
  %v100 = vld [vmem:[%s1 + $0x198] sm:$0xff]
  %v101 = vld [vmem:[%s1 + $0x1a0] sm:$0xff]
  %v102 = vld [vmem:[%s1 + $0x1a8] sm:$0xff]
  %v103 = vld [vmem:[%s1 + $0x1b0] sm:$0xff]
  %v104 = vld [vmem:[%s1 + $0x1b8] sm:$0xff]
  %v105 = vld [vmem:[%s1 + $0x1c0] sm:$0xff]
  %v106 = vld [vmem:[%s1 + $0x1c8] sm:$0xff]
  %v107 = vld [vmem:[%s1 + $0x1d0] sm:$0xff]
  %v108 = vld [vmem:[%s1 + $0x1d8] sm:$0xff]
  %v109 = vld [vmem:[%s1 + $0x1e0] sm:$0xff]
  %v110 = vld [vmem:[%s1 + $0x1e8] sm:$0xff]
  %v111 = vld [vmem:[%s1 + $0x1f0] sm:$0xff]
  %v112 = vld [vmem:[%s1 + $0x1f8] sm:$0xff]
  %v113 = vld [vmem:[%s2] sm:$0xf]
  %v115 = vlaneseq
  %v116 = vshrl.u32 %v115, 7
  %v117 = vsub.s32 0, %v116
  %v118 = vrot.slane %v113, %v117
  %v119 = vlaneseq
  %v120 = vshrl.u32 %v119, 7
  %v121 = vsub.s32 1, %v120
  %v122 = vrot.slane %v113, %v121
  %v123 = vlaneseq
  %v124 = vshrl.u32 %v123, 7
  %v125 = vsub.s32 2, %v124
  %v126 = vrot.slane %v113, %v125
  %v127 = vlaneseq
  %v128 = vshrl.u32 %v127, 7
  %v129 = vsub.s32 3, %v128
  %v130 = vrot.slane %v113, %v129
  %v151 = vunpack.c.l.b16 %v33
  %v152 = vunpack.c.h.b16 %v33
  %v153 = vunpack.c.l.b16 %v34
  %v154 = vunpack.c.h.b16 %v34
  %v155 = vunpack.c.l.b16 %v35
  %v156 = vunpack.c.h.b16 %v35
  %v157 = vunpack.c.l.b16 %v36
  %v158 = vunpack.c.h.b16 %v36
  %v159 = vunpack.c.l.b16 %v37
  %v160 = vunpack.c.h.b16 %v37
  %v161 = vunpack.c.l.b16 %v38
  %v162 = vunpack.c.h.b16 %v38
  %v163 = vunpack.c.l.b16 %v39
  %v164 = vunpack.c.h.b16 %v39
  %v165 = vunpack.c.l.b16 %v40
  %v166 = vunpack.c.h.b16 %v40
  %v167 = vunpack.c.l.b16 %v41
  %v168 = vunpack.c.h.b16 %v41
  %v169 = vunpack.c.l.b16 %v42
  %v170 = vunpack.c.h.b16 %v42
  %v171 = vunpack.c.l.b16 %v43
  %v172 = vunpack.c.h.b16 %v43
  %v173 = vunpack.c.l.b16 %v44
  %v174 = vunpack.c.h.b16 %v44
  %v175 = vunpack.c.l.b16 %v45
  %v176 = vunpack.c.h.b16 %v45
  %v177 = vunpack.c.l.b16 %v46
  %v178 = vunpack.c.h.b16 %v46
  %v179 = vunpack.c.l.b16 %v47
  %v180 = vunpack.c.h.b16 %v47
  %v181 = vunpack.c.l.b16 %v48
  %v182 = vunpack.c.h.b16 %v48
  %v183 = vpack.c.b16 %v153, %v151
  %v184 = vpack.c.b16 %v154, %v152
  %v185 = vpack.c.b16 %v157, %v155
  %v186 = vpack.c.b16 %v158, %v156
  %v187 = vpack.c.b16 %v161, %v159
  %v188 = vpack.c.b16 %v162, %v160
  %v189 = vpack.c.b16 %v165, %v163
  %v190 = vpack.c.b16 %v166, %v164
  %v191 = vpack.c.b16 %v169, %v167
  %v192 = vpack.c.b16 %v170, %v168
  %v193 = vpack.c.b16 %v173, %v171
  %v194 = vpack.c.b16 %v174, %v172
  %v195 = vpack.c.b16 %v177, %v175
  %v196 = vpack.c.b16 %v178, %v176
  %v197 = vpack.c.b16 %v181, %v179
  %v198 = vpack.c.b16 %v182, %v180
  %v279 = vunpack.c.l.b16 %v49
  %v280 = vunpack.c.h.b16 %v49
  %v281 = vunpack.c.l.b16 %v50
  %v282 = vunpack.c.h.b16 %v50
  %v283 = vunpack.c.l.b16 %v51
  %v284 = vunpack.c.h.b16 %v51
  %v285 = vunpack.c.l.b16 %v52
  %v286 = vunpack.c.h.b16 %v52
  %v287 = vunpack.c.l.b16 %v53
  %v288 = vunpack.c.h.b16 %v53
  %v289 = vunpack.c.l.b16 %v54
  %v290 = vunpack.c.h.b16 %v54
  %v291 = vunpack.c.l.b16 %v55
  %v292 = vunpack.c.h.b16 %v55
  %v293 = vunpack.c.l.b16 %v56
  %v294 = vunpack.c.h.b16 %v56
  %v295 = vunpack.c.l.b16 %v57
  %v296 = vunpack.c.h.b16 %v57
  %v297 = vunpack.c.l.b16 %v58
  %v298 = vunpack.c.h.b16 %v58
  %v299 = vunpack.c.l.b16 %v59
  %v300 = vunpack.c.h.b16 %v59
  %v301 = vunpack.c.l.b16 %v60
  %v302 = vunpack.c.h.b16 %v60
  %v303 = vunpack.c.l.b16 %v61
  %v304 = vunpack.c.h.b16 %v61
  %v305 = vunpack.c.l.b16 %v62
  %v306 = vunpack.c.h.b16 %v62
  %v307 = vunpack.c.l.b16 %v63
  %v308 = vunpack.c.h.b16 %v63
  %v309 = vunpack.c.l.b16 %v64
  %v310 = vunpack.c.h.b16 %v64
  %v311 = vunpack.c.l.b16 %v65
  %v312 = vunpack.c.h.b16 %v65
  %v313 = vunpack.c.l.b16 %v66
  %v314 = vunpack.c.h.b16 %v66
  %v315 = vunpack.c.l.b16 %v67
  %v316 = vunpack.c.h.b16 %v67
  %v317 = vunpack.c.l.b16 %v68
  %v318 = vunpack.c.h.b16 %v68
  %v319 = vunpack.c.l.b16 %v69
  %v320 = vunpack.c.h.b16 %v69
  %v321 = vunpack.c.l.b16 %v70
  %v322 = vunpack.c.h.b16 %v70
  %v323 = vunpack.c.l.b16 %v71
  %v324 = vunpack.c.h.b16 %v71
  %v325 = vunpack.c.l.b16 %v72
  %v326 = vunpack.c.h.b16 %v72
  %v327 = vunpack.c.l.b16 %v73
  %v328 = vunpack.c.h.b16 %v73
  %v329 = vunpack.c.l.b16 %v74
  %v330 = vunpack.c.h.b16 %v74
  %v331 = vunpack.c.l.b16 %v75
  %v332 = vunpack.c.h.b16 %v75
  %v333 = vunpack.c.l.b16 %v76
  %v334 = vunpack.c.h.b16 %v76
  %v335 = vunpack.c.l.b16 %v77
  %v336 = vunpack.c.h.b16 %v77
  %v337 = vunpack.c.l.b16 %v78
  %v338 = vunpack.c.h.b16 %v78
  %v339 = vunpack.c.l.b16 %v79
  %v340 = vunpack.c.h.b16 %v79
  %v341 = vunpack.c.l.b16 %v80
  %v342 = vunpack.c.h.b16 %v80
  %v343 = vunpack.c.l.b16 %v81
  %v344 = vunpack.c.h.b16 %v81
  %v345 = vunpack.c.l.b16 %v82
  %v346 = vunpack.c.h.b16 %v82
  %v347 = vunpack.c.l.b16 %v83
  %v348 = vunpack.c.h.b16 %v83
  %v349 = vunpack.c.l.b16 %v84
  %v350 = vunpack.c.h.b16 %v84
  %v351 = vunpack.c.l.b16 %v85
  %v352 = vunpack.c.h.b16 %v85
  %v353 = vunpack.c.l.b16 %v86
  %v354 = vunpack.c.h.b16 %v86
  %v355 = vunpack.c.l.b16 %v87
  %v356 = vunpack.c.h.b16 %v87
  %v357 = vunpack.c.l.b16 %v88
  %v358 = vunpack.c.h.b16 %v88
  %v359 = vunpack.c.l.b16 %v89
  %v360 = vunpack.c.h.b16 %v89
  %v361 = vunpack.c.l.b16 %v90
  %v362 = vunpack.c.h.b16 %v90
  %v363 = vunpack.c.l.b16 %v91
  %v364 = vunpack.c.h.b16 %v91
  %v365 = vunpack.c.l.b16 %v92
  %v366 = vunpack.c.h.b16 %v92
  %v367 = vunpack.c.l.b16 %v93
  %v368 = vunpack.c.h.b16 %v93
  %v369 = vunpack.c.l.b16 %v94
  %v370 = vunpack.c.h.b16 %v94
  %v371 = vunpack.c.l.b16 %v95
  %v372 = vunpack.c.h.b16 %v95
  %v373 = vunpack.c.l.b16 %v96
  %v374 = vunpack.c.h.b16 %v96
  %v375 = vunpack.c.l.b16 %v97
  %v376 = vunpack.c.h.b16 %v97
  %v377 = vunpack.c.l.b16 %v98
  %v378 = vunpack.c.h.b16 %v98
  %v379 = vunpack.c.l.b16 %v99
  %v380 = vunpack.c.h.b16 %v99
  %v381 = vunpack.c.l.b16 %v100
  %v382 = vunpack.c.h.b16 %v100
  %v383 = vunpack.c.l.b16 %v101
  %v384 = vunpack.c.h.b16 %v101
  %v385 = vunpack.c.l.b16 %v102
  %v386 = vunpack.c.h.b16 %v102
  %v387 = vunpack.c.l.b16 %v103
  %v388 = vunpack.c.h.b16 %v103
  %v389 = vunpack.c.l.b16 %v104
  %v390 = vunpack.c.h.b16 %v104
  %v391 = vunpack.c.l.b16 %v105
  %v392 = vunpack.c.h.b16 %v105
  %v393 = vunpack.c.l.b16 %v106
  %v394 = vunpack.c.h.b16 %v106
  %v395 = vunpack.c.l.b16 %v107
  %v396 = vunpack.c.h.b16 %v107
  %v397 = vunpack.c.l.b16 %v108
  %v398 = vunpack.c.h.b16 %v108
  %v399 = vunpack.c.l.b16 %v109
  %v400 = vunpack.c.h.b16 %v109
  %v401 = vunpack.c.l.b16 %v110
  %v402 = vunpack.c.h.b16 %v110
  %v403 = vunpack.c.l.b16 %v111
  %v404 = vunpack.c.h.b16 %v111
  %v405 = vunpack.c.l.b16 %v112
  %v406 = vunpack.c.h.b16 %v112
  %v407 = vpack.c.b16 %v283, %v279
  %v408 = vpack.c.b16 %v284, %v280
  %v409 = vpack.c.b16 %v285, %v281
  %v410 = vpack.c.b16 %v286, %v282
  %v411 = vpack.c.b16 %v291, %v287
  %v412 = vpack.c.b16 %v292, %v288
  %v413 = vpack.c.b16 %v293, %v289
  %v414 = vpack.c.b16 %v294, %v290
  %v415 = vpack.c.b16 %v299, %v295
  %v416 = vpack.c.b16 %v300, %v296
  %v417 = vpack.c.b16 %v301, %v297
  %v418 = vpack.c.b16 %v302, %v298
  %v419 = vpack.c.b16 %v307, %v303
  %v420 = vpack.c.b16 %v308, %v304
  %v421 = vpack.c.b16 %v309, %v305
  %v422 = vpack.c.b16 %v310, %v306
  %v423 = vpack.c.b16 %v315, %v311
  %v424 = vpack.c.b16 %v316, %v312
  %v425 = vpack.c.b16 %v317, %v313
  %v426 = vpack.c.b16 %v318, %v314
  %v427 = vpack.c.b16 %v323, %v319
  %v428 = vpack.c.b16 %v324, %v320
  %v429 = vpack.c.b16 %v325, %v321
  %v430 = vpack.c.b16 %v326, %v322
  %v431 = vpack.c.b16 %v331, %v327
  %v432 = vpack.c.b16 %v332, %v328
  %v433 = vpack.c.b16 %v333, %v329
  %v434 = vpack.c.b16 %v334, %v330
  %v435 = vpack.c.b16 %v339, %v335
  %v436 = vpack.c.b16 %v340, %v336
  %v437 = vpack.c.b16 %v341, %v337
  %v438 = vpack.c.b16 %v342, %v338
  %v439 = vpack.c.b16 %v347, %v343
  %v440 = vpack.c.b16 %v348, %v344
  %v441 = vpack.c.b16 %v349, %v345
  %v442 = vpack.c.b16 %v350, %v346
  %v443 = vpack.c.b16 %v355, %v351
  %v444 = vpack.c.b16 %v356, %v352
  %v445 = vpack.c.b16 %v357, %v353
  %v446 = vpack.c.b16 %v358, %v354
  %v447 = vpack.c.b16 %v363, %v359
  %v448 = vpack.c.b16 %v364, %v360
  %v449 = vpack.c.b16 %v365, %v361
  %v450 = vpack.c.b16 %v366, %v362
  %v451 = vpack.c.b16 %v371, %v367
  %v452 = vpack.c.b16 %v372, %v368
  %v453 = vpack.c.b16 %v373, %v369
  %v454 = vpack.c.b16 %v374, %v370
  %v455 = vpack.c.b16 %v379, %v375
  %v456 = vpack.c.b16 %v380, %v376
  %v457 = vpack.c.b16 %v381, %v377
  %v458 = vpack.c.b16 %v382, %v378
  %v459 = vpack.c.b16 %v387, %v383
  %v460 = vpack.c.b16 %v388, %v384
  %v461 = vpack.c.b16 %v389, %v385
  %v462 = vpack.c.b16 %v390, %v386
  %v463 = vpack.c.b16 %v395, %v391
  %v464 = vpack.c.b16 %v396, %v392
  %v465 = vpack.c.b16 %v397, %v393
  %v466 = vpack.c.b16 %v398, %v394
  %v467 = vpack.c.b16 %v403, %v399
  %v468 = vpack.c.b16 %v404, %v400
  %v469 = vpack.c.b16 %v405, %v401
  %v470 = vpack.c.b16 %v406, %v402
  %535 = vmatprep.subr.bf16.mxu0 %v408
  %536 = vmatpush1.bf16.msra.mxu0 %v407
  %537 = vmatprep.subr.bf16.mxu0 %v412
  %538 = vmatpush1.bf16.msra.mxu0 %v411
  %539 = vmatprep.subr.bf16.mxu0 %v416
  %540 = vmatpush1.bf16.msra.mxu0 %v415
  %541 = vmatprep.subr.bf16.mxu0 %v420
  %542 = vmatpush1.bf16.msra.mxu0 %v419
  %543 = vmatprep.subr.bf16.mxu0 %v424
  %544 = vmatpush1.bf16.msra.mxu0 %v423
  %545 = vmatprep.subr.bf16.mxu0 %v428
  %546 = vmatpush1.bf16.msra.mxu0 %v427
  %547 = vmatprep.subr.bf16.mxu0 %v432
  %548 = vmatpush1.bf16.msra.mxu0 %v431
  %549 = vmatprep.subr.bf16.mxu0 %v436
  %550 = vmatpush1.bf16.msra.mxu0 %v435
  %551 = vmatprep.subr.bf16.mxu0 %v440
  %552 = vmatpush1.bf16.msra.mxu0 %v439
  %553 = vmatprep.subr.bf16.mxu0 %v444
  %554 = vmatpush1.bf16.msra.mxu0 %v443
  %555 = vmatprep.subr.bf16.mxu0 %v448
  %556 = vmatpush1.bf16.msra.mxu0 %v447
  %557 = vmatprep.subr.bf16.mxu0 %v452
  %558 = vmatpush1.bf16.msra.mxu0 %v451
  %559 = vmatprep.subr.bf16.mxu0 %v456
  %560 = vmatpush1.bf16.msra.mxu0 %v455
  %561 = vmatprep.subr.bf16.mxu0 %v460
  %562 = vmatpush1.bf16.msra.mxu0 %v459
  %563 = vmatprep.subr.bf16.mxu0 %v464
  %564 = vmatpush1.bf16.msra.mxu0 %v463
  %565 = vmatprep.subr.bf16.mxu0 %v468
  %566 = vmatpush1.bf16.msra.mxu0 %v467
  %567 = vmatprep.mubr.bf16.mxu0 %v184
  %568 = vmatmul.mubr.bf16.gmra.mrb[0].mxu0 %v183
  %v569 = vpop.f32.mrb[0].mxu0
  %v570 = vadd.f32 %v118, %v569
  %v571 = vpop.f32.mrb[0].mxu0
  %v572 = vadd.f32 %v122, %v571
  %v573 = vpop.f32.mrb[0].mxu0
  %v574 = vadd.f32 %v118, %v573
  %v575 = vpop.f32.mrb[0].mxu0
  %v576 = vadd.f32 %v122, %v575
  %577 = vmatprep.mubr.bf16.mxu0 %v186
  %578 = vmatmul.mubr.bf16.gmra.mrb[0].mxu0 %v185
  %v579 = vpop.f32.mrb[0].mxu0
  %v580 = vadd.f32 %v118, %v579
  %v581 = vpop.f32.mrb[0].mxu0
  %v582 = vadd.f32 %v122, %v581
  %v583 = vpop.f32.mrb[0].mxu0
  %v584 = vadd.f32 %v118, %v583
  %v585 = vpop.f32.mrb[0].mxu0
  %v586 = vadd.f32 %v122, %v585
  %587 = vmatprep.mubr.bf16.mxu0 %v188
  %588 = vmatmul.mubr.bf16.gmra.mrb[0].mxu0 %v187
  %v589 = vpop.f32.mrb[0].mxu0
  %v590 = vadd.f32 %v118, %v589
  %v591 = vpop.f32.mrb[0].mxu0
  %v592 = vadd.f32 %v122, %v591
  %v593 = vpop.f32.mrb[0].mxu0
  %v594 = vadd.f32 %v118, %v593
  %v595 = vpop.f32.mrb[0].mxu0
  %v596 = vadd.f32 %v122, %v595
  %597 = vmatprep.mubr.bf16.mxu0 %v190
  %598 = vmatmul.mubr.bf16.gmra.mrb[0].mxu0 %v189
  %v599 = vpop.f32.mrb[0].mxu0
  %v600 = vadd.f32 %v118, %v599
  %v601 = vpop.f32.mrb[0].mxu0
  %v602 = vadd.f32 %v122, %v601
  %v603 = vpop.f32.mrb[0].mxu0
  %v604 = vadd.f32 %v118, %v603
  %v605 = vpop.f32.mrb[0].mxu0
  %v606 = vadd.f32 %v122, %v605
  %607 = vmatprep.mubr.bf16.mxu0 %v192
  %608 = vmatmul.mubr.bf16.gmra.mrb[0].mxu0 %v191
  %v609 = vpop.f32.mrb[0].mxu0
  %v610 = vadd.f32 %v118, %v609
  %v611 = vpop.f32.mrb[0].mxu0
  %v612 = vadd.f32 %v122, %v611
  %v613 = vpop.f32.mrb[0].mxu0
  %v614 = vadd.f32 %v118, %v613
  %v615 = vpop.f32.mrb[0].mxu0
  %v616 = vadd.f32 %v122, %v615
  %617 = vmatprep.mubr.bf16.mxu0 %v194
  %618 = vmatmul.mubr.bf16.gmra.mrb[0].mxu0 %v193
  %v619 = vpop.f32.mrb[0].mxu0
  %v620 = vadd.f32 %v118, %v619
  %v621 = vpop.f32.mrb[0].mxu0
  %v622 = vadd.f32 %v122, %v621
  %v623 = vpop.f32.mrb[0].mxu0
  %v624 = vadd.f32 %v118, %v623
  %v625 = vpop.f32.mrb[0].mxu0
  %v626 = vadd.f32 %v122, %v625
  %627 = vmatprep.mubr.bf16.mxu0 %v196
  %628 = vmatmul.mubr.bf16.gmra.mrb[0].mxu0 %v195
  %v629 = vpop.f32.mrb[0].mxu0
  %v630 = vadd.f32 %v118, %v629
  %v631 = vpop.f32.mrb[0].mxu0
  %v632 = vadd.f32 %v122, %v631
  %v633 = vpop.f32.mrb[0].mxu0
  %v634 = vadd.f32 %v118, %v633
  %v635 = vpop.f32.mrb[0].mxu0
  %v636 = vadd.f32 %v122, %v635
  %637 = vmatprep.mubr.bf16.mxu0 %v198
  %638 = vmatmul.mubr.bf16.gmra.mrb[0].mxu0 %v197
  %v639 = vpop.f32.mrb[0].mxu0
  %v640 = vadd.f32 %v118, %v639
  %v641 = vpop.f32.mrb[0].mxu0
  %v642 = vadd.f32 %v122, %v641
  %v643 = vpop.f32.mrb[0].mxu0
  %v644 = vadd.f32 %v118, %v643
  %v645 = vpop.f32.mrb[0].mxu0
  %v646 = vadd.f32 %v122, %v645
  %647 = vdwg.mxu0
  %648 = vmatprep.subr.bf16.mxu0 %v410
  %649 = vmatpush1.bf16.msra.mxu0 %v409
  %650 = vmatprep.subr.bf16.mxu0 %v414
  %651 = vmatpush1.bf16.msra.mxu0 %v413
  %652 = vmatprep.subr.bf16.mxu0 %v418
  %653 = vmatpush1.bf16.msra.mxu0 %v417
  %654 = vmatprep.subr.bf16.mxu0 %v422
  %655 = vmatpush1.bf16.msra.mxu0 %v421
  %656 = vmatprep.subr.bf16.mxu0 %v426
  %657 = vmatpush1.bf16.msra.mxu0 %v425
  %658 = vmatprep.subr.bf16.mxu0 %v430
  %659 = vmatpush1.bf16.msra.mxu0 %v429
  %660 = vmatprep.subr.bf16.mxu0 %v434
  %661 = vmatpush1.bf16.msra.mxu0 %v433
  %662 = vmatprep.subr.bf16.mxu0 %v438
  %663 = vmatpush1.bf16.msra.mxu0 %v437
  %664 = vmatprep.subr.bf16.mxu0 %v442
  %665 = vmatpush1.bf16.msra.mxu0 %v441
  %666 = vmatprep.subr.bf16.mxu0 %v446
  %667 = vmatpush1.bf16.msra.mxu0 %v445
  %668 = vmatprep.subr.bf16.mxu0 %v450
  %669 = vmatpush1.bf16.msra.mxu0 %v449
  %670 = vmatprep.subr.bf16.mxu0 %v454
  %671 = vmatpush1.bf16.msra.mxu0 %v453
  %672 = vmatprep.subr.bf16.mxu0 %v458
  %673 = vmatpush1.bf16.msra.mxu0 %v457
  %674 = vmatprep.subr.bf16.mxu0 %v462
  %675 = vmatpush1.bf16.msra.mxu0 %v461
  %676 = vmatprep.subr.bf16.mxu0 %v466
  %677 = vmatpush1.bf16.msra.mxu0 %v465
  %678 = vmatprep.subr.bf16.mxu0 %v470
  %679 = vmatpush1.bf16.msra.mxu0 %v469
  %680 = vmatprep.mubr.bf16.mxu0 %v184
  %681 = vmatmul.mubr.bf16.gmra.mrb[0].mxu0 %v183
  %v682 = vpop.f32.mrb[0].mxu0
  %v683 = vadd.f32 %v126, %v682
  %v684 = vpop.f32.mrb[0].mxu0
  %v685 = vadd.f32 %v130, %v684
  %v686 = vpop.f32.mrb[0].mxu0
  %v687 = vadd.f32 %v126, %v686
  %v688 = vpop.f32.mrb[0].mxu0
  %v689 = vadd.f32 %v130, %v688
  %690 = vmatprep.mubr.bf16.mxu0 %v186
  %691 = vmatmul.mubr.bf16.gmra.mrb[0].mxu0 %v185
  %v692 = vpop.f32.mrb[0].mxu0
  %v693 = vadd.f32 %v126, %v692
  %v694 = vpop.f32.mrb[0].mxu0
  %v695 = vadd.f32 %v130, %v694
  %v696 = vpop.f32.mrb[0].mxu0
  %v697 = vadd.f32 %v126, %v696
  %v698 = vpop.f32.mrb[0].mxu0
  %v699 = vadd.f32 %v130, %v698
  %700 = vmatprep.mubr.bf16.mxu0 %v188
  %701 = vmatmul.mubr.bf16.gmra.mrb[0].mxu0 %v187
  %v702 = vpop.f32.mrb[0].mxu0
  %v703 = vadd.f32 %v126, %v702
  %v704 = vpop.f32.mrb[0].mxu0
  %v705 = vadd.f32 %v130, %v704
  %v706 = vpop.f32.mrb[0].mxu0
  %v707 = vadd.f32 %v126, %v706
  %v708 = vpop.f32.mrb[0].mxu0
  %v709 = vadd.f32 %v130, %v708
  %710 = vmatprep.mubr.bf16.mxu0 %v190
  %711 = vmatmul.mubr.bf16.gmra.mrb[0].mxu0 %v189
  %v712 = vpop.f32.mrb[0].mxu0
  %v713 = vadd.f32 %v126, %v712
  %v714 = vpop.f32.mrb[0].mxu0
  %v715 = vadd.f32 %v130, %v714
  %v716 = vpop.f32.mrb[0].mxu0
  %v717 = vadd.f32 %v126, %v716
  %v718 = vpop.f32.mrb[0].mxu0
  %v719 = vadd.f32 %v130, %v718
  %720 = vmatprep.mubr.bf16.mxu0 %v192
  %721 = vmatmul.mubr.bf16.gmra.mrb[0].mxu0 %v191
  %v722 = vpop.f32.mrb[0].mxu0
  %v723 = vadd.f32 %v126, %v722
  %v724 = vpop.f32.mrb[0].mxu0
  %v725 = vadd.f32 %v130, %v724
  %v726 = vpop.f32.mrb[0].mxu0
  %v727 = vadd.f32 %v126, %v726
  %v728 = vpop.f32.mrb[0].mxu0
  %v729 = vadd.f32 %v130, %v728
  %730 = vmatprep.mubr.bf16.mxu0 %v194
  %731 = vmatmul.mubr.bf16.gmra.mrb[0].mxu0 %v193
  %v732 = vpop.f32.mrb[0].mxu0
  %v733 = vadd.f32 %v126, %v732
  %v734 = vpop.f32.mrb[0].mxu0
  %v735 = vadd.f32 %v130, %v734
  %v736 = vpop.f32.mrb[0].mxu0
  %v737 = vadd.f32 %v126, %v736
  %v738 = vpop.f32.mrb[0].mxu0
  %v739 = vadd.f32 %v130, %v738
  %740 = vmatprep.mubr.bf16.mxu0 %v196
  %741 = vmatmul.mubr.bf16.gmra.mrb[0].mxu0 %v195
  %v742 = vpop.f32.mrb[0].mxu0
  %v743 = vadd.f32 %v126, %v742
  %v744 = vpop.f32.mrb[0].mxu0
  %v745 = vadd.f32 %v130, %v744
  %v746 = vpop.f32.mrb[0].mxu0
  %v747 = vadd.f32 %v126, %v746
  %v748 = vpop.f32.mrb[0].mxu0
  %v749 = vadd.f32 %v130, %v748
  %750 = vmatprep.mubr.bf16.mxu0 %v198
  %751 = vmatmul.mubr.bf16.gmra.mrb[0].mxu0 %v197
  %v752 = vpop.f32.mrb[0].mxu0
  %v753 = vadd.f32 %v126, %v752
  %v754 = vpop.f32.mrb[0].mxu0
  %v755 = vadd.f32 %v130, %v754
  %v756 = vpop.f32.mrb[0].mxu0
  %v757 = vadd.f32 %v126, %v756
  %v758 = vpop.f32.mrb[0].mxu0
  %v759 = vadd.f32 %v130, %v758
  %760 = vdwg.mxu0
  %v761 = vmax.f32 %v570, 0.0
  %v762 = vmax.f32 %v572, 0.0
  %v763 = vmax.f32 %v683, 0.0
  %v764 = vmax.f32 %v685, 0.0
  %v765 = vmax.f32 %v574, 0.0
  %v766 = vmax.f32 %v576, 0.0
  %v767 = vmax.f32 %v687, 0.0
  %v768 = vmax.f32 %v689, 0.0
  %v769 = vmax.f32 %v580, 0.0
  %v770 = vmax.f32 %v582, 0.0
  %v771 = vmax.f32 %v693, 0.0
  %v772 = vmax.f32 %v695, 0.0
  %v773 = vmax.f32 %v584, 0.0
  %v774 = vmax.f32 %v586, 0.0
  %v775 = vmax.f32 %v697, 0.0
  %v776 = vmax.f32 %v699, 0.0
  %v777 = vmax.f32 %v590, 0.0
  %v778 = vmax.f32 %v592, 0.0
  %v779 = vmax.f32 %v703, 0.0
  %v780 = vmax.f32 %v705, 0.0
  %v781 = vmax.f32 %v594, 0.0
  %v782 = vmax.f32 %v596, 0.0
  %v783 = vmax.f32 %v707, 0.0
  %v784 = vmax.f32 %v709, 0.0
  %v785 = vmax.f32 %v600, 0.0
  %v786 = vmax.f32 %v602, 0.0
  %v787 = vmax.f32 %v713, 0.0
  %v788 = vmax.f32 %v715, 0.0
  %v789 = vmax.f32 %v604, 0.0
  %v790 = vmax.f32 %v606, 0.0
  %v791 = vmax.f32 %v717, 0.0
  %v792 = vmax.f32 %v719, 0.0
  %v793 = vmax.f32 %v610, 0.0
  %v794 = vmax.f32 %v612, 0.0
  %v795 = vmax.f32 %v723, 0.0
  %v796 = vmax.f32 %v725, 0.0
  %v797 = vmax.f32 %v614, 0.0
  %v798 = vmax.f32 %v616, 0.0
  %v799 = vmax.f32 %v727, 0.0
  %v800 = vmax.f32 %v729, 0.0
  %v801 = vmax.f32 %v620, 0.0
  %v802 = vmax.f32 %v622, 0.0
  %v803 = vmax.f32 %v733, 0.0
  %v804 = vmax.f32 %v735, 0.0
  %v805 = vmax.f32 %v624, 0.0
  %v806 = vmax.f32 %v626, 0.0
  %v807 = vmax.f32 %v737, 0.0
  %v808 = vmax.f32 %v739, 0.0
  %v809 = vmax.f32 %v630, 0.0
  %v810 = vmax.f32 %v632, 0.0
  %v811 = vmax.f32 %v743, 0.0
  %v812 = vmax.f32 %v745, 0.0
  %v813 = vmax.f32 %v634, 0.0
  %v814 = vmax.f32 %v636, 0.0
  %v815 = vmax.f32 %v747, 0.0
  %v816 = vmax.f32 %v749, 0.0
  %v817 = vmax.f32 %v640, 0.0
  %v818 = vmax.f32 %v642, 0.0
  %v819 = vmax.f32 %v753, 0.0
  %v820 = vmax.f32 %v755, 0.0
  %v821 = vmax.f32 %v644, 0.0
  %v822 = vmax.f32 %v646, 0.0
  %v823 = vmax.f32 %v757, 0.0
  %v824 = vmax.f32 %v759, 0.0
  %v825 = vpack.c.bf16 %v765, %v761
  %v826 = vpack.c.bf16 %v766, %v762
  %v827 = vpack.c.bf16 %v767, %v763
  %v828 = vpack.c.bf16 %v768, %v764
  %v829 = vpack.c.bf16 %v773, %v769
  %v830 = vpack.c.bf16 %v774, %v770
  %v831 = vpack.c.bf16 %v775, %v771
  %v832 = vpack.c.bf16 %v776, %v772
  %v833 = vpack.c.bf16 %v781, %v777
  %v834 = vpack.c.bf16 %v782, %v778
  %v835 = vpack.c.bf16 %v783, %v779
  %v836 = vpack.c.bf16 %v784, %v780
  %v837 = vpack.c.bf16 %v789, %v785
  %v838 = vpack.c.bf16 %v790, %v786
  %v839 = vpack.c.bf16 %v791, %v787
  %v840 = vpack.c.bf16 %v792, %v788
  %v841 = vpack.c.bf16 %v797, %v793
  %v842 = vpack.c.bf16 %v798, %v794
  %v843 = vpack.c.bf16 %v799, %v795
  %v844 = vpack.c.bf16 %v800, %v796
  %v845 = vpack.c.bf16 %v805, %v801
  %v846 = vpack.c.bf16 %v806, %v802
  %v847 = vpack.c.bf16 %v807, %v803
  %v848 = vpack.c.bf16 %v808, %v804
  %v849 = vpack.c.bf16 %v813, %v809
  %v850 = vpack.c.bf16 %v814, %v810
  %v851 = vpack.c.bf16 %v815, %v811
  %v852 = vpack.c.bf16 %v816, %v812
  %v853 = vpack.c.bf16 %v821, %v817
  %v854 = vpack.c.bf16 %v822, %v818
  %v855 = vpack.c.bf16 %v823, %v819
  %v856 = vpack.c.bf16 %v824, %v820
  %v857 = vld [vmem:[%s3] sm:$0xff]
  %v858 = vld [vmem:[%s3 + $0x8] sm:$0xff]
  %v859 = vld [vmem:[%s3 + $0x10] sm:$0xff]
  %v860 = vld [vmem:[%s3 + $0x18] sm:$0xff]
  %v861 = vld [vmem:[%s3 + $0x20] sm:$0xff]
  %v862 = vld [vmem:[%s3 + $0x28] sm:$0xff]
  %v863 = vld [vmem:[%s3 + $0x30] sm:$0xff]
  %v864 = vld [vmem:[%s3 + $0x38] sm:$0xff]
  %v865 = vld [vmem:[%s3 + $0x40] sm:$0xff]
  %v866 = vld [vmem:[%s3 + $0x48] sm:$0xff]
  %v867 = vld [vmem:[%s3 + $0x50] sm:$0xff]
  %v868 = vld [vmem:[%s3 + $0x58] sm:$0xff]
  %v869 = vld [vmem:[%s3 + $0x60] sm:$0xff]
  %v870 = vld [vmem:[%s3 + $0x68] sm:$0xff]
  %v871 = vld [vmem:[%s3 + $0x70] sm:$0xff]
  %v872 = vld [vmem:[%s3 + $0x78] sm:$0xff]
  %v873 = vld [vmem:[%s3 + $0x80] sm:$0xff]
  %v874 = vld [vmem:[%s3 + $0x88] sm:$0xff]
  %v875 = vld [vmem:[%s3 + $0x90] sm:$0xff]
  %v876 = vld [vmem:[%s3 + $0x98] sm:$0xff]
  %v877 = vld [vmem:[%s3 + $0xa0] sm:$0xff]
  %v878 = vld [vmem:[%s3 + $0xa8] sm:$0xff]
  %v879 = vld [vmem:[%s3 + $0xb0] sm:$0xff]
  %v880 = vld [vmem:[%s3 + $0xb8] sm:$0xff]
  %v881 = vld [vmem:[%s3 + $0xc0] sm:$0xff]
  %v882 = vld [vmem:[%s3 + $0xc8] sm:$0xff]
  %v883 = vld [vmem:[%s3 + $0xd0] sm:$0xff]
  %v884 = vld [vmem:[%s3 + $0xd8] sm:$0xff]
  %v885 = vld [vmem:[%s3 + $0xe0] sm:$0xff]
  %v886 = vld [vmem:[%s3 + $0xe8] sm:$0xff]
  %v887 = vld [vmem:[%s3 + $0xf0] sm:$0xff]
  %v888 = vld [vmem:[%s3 + $0xf8] sm:$0xff]
  %v889 = vld [vmem:[%s3 + $0x100] sm:$0xff]
  %v890 = vld [vmem:[%s3 + $0x108] sm:$0xff]
  %v891 = vld [vmem:[%s3 + $0x110] sm:$0xff]
  %v892 = vld [vmem:[%s3 + $0x118] sm:$0xff]
  %v893 = vld [vmem:[%s3 + $0x120] sm:$0xff]
  %v894 = vld [vmem:[%s3 + $0x128] sm:$0xff]
  %v895 = vld [vmem:[%s3 + $0x130] sm:$0xff]
  %v896 = vld [vmem:[%s3 + $0x138] sm:$0xff]
  %v897 = vld [vmem:[%s3 + $0x140] sm:$0xff]
  %v898 = vld [vmem:[%s3 + $0x148] sm:$0xff]
  %v899 = vld [vmem:[%s3 + $0x150] sm:$0xff]
  %v900 = vld [vmem:[%s3 + $0x158] sm:$0xff]
  %v901 = vld [vmem:[%s3 + $0x160] sm:$0xff]
  %v902 = vld [vmem:[%s3 + $0x168] sm:$0xff]
  %v903 = vld [vmem:[%s3 + $0x170] sm:$0xff]
  %v904 = vld [vmem:[%s3 + $0x178] sm:$0xff]
  %v905 = vld [vmem:[%s3 + $0x180] sm:$0xff]
  %v906 = vld [vmem:[%s3 + $0x188] sm:$0xff]
  %v907 = vld [vmem:[%s3 + $0x190] sm:$0xff]
  %v908 = vld [vmem:[%s3 + $0x198] sm:$0xff]
  %v909 = vld [vmem:[%s3 + $0x1a0] sm:$0xff]
  %v910 = vld [vmem:[%s3 + $0x1a8] sm:$0xff]
  %v911 = vld [vmem:[%s3 + $0x1b0] sm:$0xff]
  %v912 = vld [vmem:[%s3 + $0x1b8] sm:$0xff]
  %v913 = vld [vmem:[%s3 + $0x1c0] sm:$0xff]
  %v914 = vld [vmem:[%s3 + $0x1c8] sm:$0xff]
  %v915 = vld [vmem:[%s3 + $0x1d0] sm:$0xff]
  %v916 = vld [vmem:[%s3 + $0x1d8] sm:$0xff]
  %v917 = vld [vmem:[%s3 + $0x1e0] sm:$0xff]
  %v918 = vld [vmem:[%s3 + $0x1e8] sm:$0xff]
  %v919 = vld [vmem:[%s3 + $0x1f0] sm:$0xff]
  %v920 = vld [vmem:[%s3 + $0x1f8] sm:$0xff]
  %v921 = vld [vmem:[%s4] sm:$0x3]
  %v923 = vlaneseq
  %v924 = vshrl.u32 %v923, 7
  %v925 = vsub.s32 0, %v924
  %v926 = vrot.slane %v921, %v925
  %v927 = vlaneseq
  %v928 = vshrl.u32 %v927, 7
  %v929 = vsub.s32 1, %v928
  %v930 = vrot.slane %v921, %v929
  %v997 = vunpack.c.l.b16 %v857
  %v998 = vunpack.c.h.b16 %v857
  %v999 = vunpack.c.l.b16 %v858
  %v1000 = vunpack.c.h.b16 %v858
  %v1001 = vunpack.c.l.b16 %v859
  %v1002 = vunpack.c.h.b16 %v859
  %v1003 = vunpack.c.l.b16 %v860
  %v1004 = vunpack.c.h.b16 %v860
  %v1005 = vunpack.c.l.b16 %v861
  %v1006 = vunpack.c.h.b16 %v861
  %v1007 = vunpack.c.l.b16 %v862
  %v1008 = vunpack.c.h.b16 %v862
  %v1009 = vunpack.c.l.b16 %v863
  %v1010 = vunpack.c.h.b16 %v863
  %v1011 = vunpack.c.l.b16 %v864
  %v1012 = vunpack.c.h.b16 %v864
  %v1013 = vunpack.c.l.b16 %v865
  %v1014 = vunpack.c.h.b16 %v865
  %v1015 = vunpack.c.l.b16 %v866
  %v1016 = vunpack.c.h.b16 %v866
  %v1017 = vunpack.c.l.b16 %v867
  %v1018 = vunpack.c.h.b16 %v867
  %v1019 = vunpack.c.l.b16 %v868
  %v1020 = vunpack.c.h.b16 %v868
  %v1021 = vunpack.c.l.b16 %v869
  %v1022 = vunpack.c.h.b16 %v869
  %v1023 = vunpack.c.l.b16 %v870
  %v1024 = vunpack.c.h.b16 %v870
  %v1025 = vunpack.c.l.b16 %v871
  %v1026 = vunpack.c.h.b16 %v871
  %v1027 = vunpack.c.l.b16 %v872
  %v1028 = vunpack.c.h.b16 %v872
  %v1029 = vunpack.c.l.b16 %v873
  %v1030 = vunpack.c.h.b16 %v873
  %v1031 = vunpack.c.l.b16 %v874
  %v1032 = vunpack.c.h.b16 %v874
  %v1033 = vunpack.c.l.b16 %v875
  %v1034 = vunpack.c.h.b16 %v875
  %v1035 = vunpack.c.l.b16 %v876
  %v1036 = vunpack.c.h.b16 %v876
  %v1037 = vunpack.c.l.b16 %v877
  %v1038 = vunpack.c.h.b16 %v877
  %v1039 = vunpack.c.l.b16 %v878
  %v1040 = vunpack.c.h.b16 %v878
  %v1041 = vunpack.c.l.b16 %v879
  %v1042 = vunpack.c.h.b16 %v879
  %v1043 = vunpack.c.l.b16 %v880
  %v1044 = vunpack.c.h.b16 %v880
  %v1045 = vunpack.c.l.b16 %v881
  %v1046 = vunpack.c.h.b16 %v881
  %v1047 = vunpack.c.l.b16 %v882
  %v1048 = vunpack.c.h.b16 %v882
  %v1049 = vunpack.c.l.b16 %v883
  %v1050 = vunpack.c.h.b16 %v883
  %v1051 = vunpack.c.l.b16 %v884
  %v1052 = vunpack.c.h.b16 %v884
  %v1053 = vunpack.c.l.b16 %v885
  %v1054 = vunpack.c.h.b16 %v885
  %v1055 = vunpack.c.l.b16 %v886
  %v1056 = vunpack.c.h.b16 %v886
  %v1057 = vunpack.c.l.b16 %v887
  %v1058 = vunpack.c.h.b16 %v887
  %v1059 = vunpack.c.l.b16 %v888
  %v1060 = vunpack.c.h.b16 %v888
  %v1061 = vunpack.c.l.b16 %v889
  %v1062 = vunpack.c.h.b16 %v889
  %v1063 = vunpack.c.l.b16 %v890
  %v1064 = vunpack.c.h.b16 %v890
  %v1065 = vunpack.c.l.b16 %v891
  %v1066 = vunpack.c.h.b16 %v891
  %v1067 = vunpack.c.l.b16 %v892
  %v1068 = vunpack.c.h.b16 %v892
  %v1069 = vunpack.c.l.b16 %v893
  %v1070 = vunpack.c.h.b16 %v893
  %v1071 = vunpack.c.l.b16 %v894
  %v1072 = vunpack.c.h.b16 %v894
  %v1073 = vunpack.c.l.b16 %v895
  %v1074 = vunpack.c.h.b16 %v895
  %v1075 = vunpack.c.l.b16 %v896
  %v1076 = vunpack.c.h.b16 %v896
  %v1077 = vunpack.c.l.b16 %v897
  %v1078 = vunpack.c.h.b16 %v897
  %v1079 = vunpack.c.l.b16 %v898
  %v1080 = vunpack.c.h.b16 %v898
  %v1081 = vunpack.c.l.b16 %v899
  %v1082 = vunpack.c.h.b16 %v899
  %v1083 = vunpack.c.l.b16 %v900
  %v1084 = vunpack.c.h.b16 %v900
  %v1085 = vunpack.c.l.b16 %v901
  %v1086 = vunpack.c.h.b16 %v901
  %v1087 = vunpack.c.l.b16 %v902
  %v1088 = vunpack.c.h.b16 %v902
  %v1089 = vunpack.c.l.b16 %v903
  %v1090 = vunpack.c.h.b16 %v903
  %v1091 = vunpack.c.l.b16 %v904
  %v1092 = vunpack.c.h.b16 %v904
  %v1093 = vunpack.c.l.b16 %v905
  %v1094 = vunpack.c.h.b16 %v905
  %v1095 = vunpack.c.l.b16 %v906
  %v1096 = vunpack.c.h.b16 %v906
  %v1097 = vunpack.c.l.b16 %v907
  %v1098 = vunpack.c.h.b16 %v907
  %v1099 = vunpack.c.l.b16 %v908
  %v1100 = vunpack.c.h.b16 %v908
  %v1101 = vunpack.c.l.b16 %v909
  %v1102 = vunpack.c.h.b16 %v909
  %v1103 = vunpack.c.l.b16 %v910
  %v1104 = vunpack.c.h.b16 %v910
  %v1105 = vunpack.c.l.b16 %v911
  %v1106 = vunpack.c.h.b16 %v911
  %v1107 = vunpack.c.l.b16 %v912
  %v1108 = vunpack.c.h.b16 %v912
  %v1109 = vunpack.c.l.b16 %v913
  %v1110 = vunpack.c.h.b16 %v913
  %v1111 = vunpack.c.l.b16 %v914
  %v1112 = vunpack.c.h.b16 %v914
  %v1113 = vunpack.c.l.b16 %v915
  %v1114 = vunpack.c.h.b16 %v915
  %v1115 = vunpack.c.l.b16 %v916
  %v1116 = vunpack.c.h.b16 %v916
  %v1117 = vunpack.c.l.b16 %v917
  %v1118 = vunpack.c.h.b16 %v917
  %v1119 = vunpack.c.l.b16 %v918
  %v1120 = vunpack.c.h.b16 %v918
  %v1121 = vunpack.c.l.b16 %v919
  %v1122 = vunpack.c.h.b16 %v919
  %v1123 = vunpack.c.l.b16 %v920
  %v1124 = vunpack.c.h.b16 %v920
  %v1125 = vpack.c.b16 %v999, %v997
  %v1126 = vpack.c.b16 %v1000, %v998
  %v1127 = vpack.c.b16 %v1003, %v1001
  %v1128 = vpack.c.b16 %v1004, %v1002
  %v1129 = vpack.c.b16 %v1007, %v1005
  %v1130 = vpack.c.b16 %v1008, %v1006
  %v1131 = vpack.c.b16 %v1011, %v1009
  %v1132 = vpack.c.b16 %v1012, %v1010
  %v1133 = vpack.c.b16 %v1015, %v1013
  %v1134 = vpack.c.b16 %v1016, %v1014
  %v1135 = vpack.c.b16 %v1019, %v1017
  %v1136 = vpack.c.b16 %v1020, %v1018
  %v1137 = vpack.c.b16 %v1023, %v1021
  %v1138 = vpack.c.b16 %v1024, %v1022
  %v1139 = vpack.c.b16 %v1027, %v1025
  %v1140 = vpack.c.b16 %v1028, %v1026
  %v1141 = vpack.c.b16 %v1031, %v1029
  %v1142 = vpack.c.b16 %v1032, %v1030
  %v1143 = vpack.c.b16 %v1035, %v1033
  %v1144 = vpack.c.b16 %v1036, %v1034
  %v1145 = vpack.c.b16 %v1039, %v1037
  %v1146 = vpack.c.b16 %v1040, %v1038
  %v1147 = vpack.c.b16 %v1043, %v1041
  %v1148 = vpack.c.b16 %v1044, %v1042
  %v1149 = vpack.c.b16 %v1047, %v1045
  %v1150 = vpack.c.b16 %v1048, %v1046
  %v1151 = vpack.c.b16 %v1051, %v1049
  %v1152 = vpack.c.b16 %v1052, %v1050
  %v1153 = vpack.c.b16 %v1055, %v1053
  %v1154 = vpack.c.b16 %v1056, %v1054
  %v1155 = vpack.c.b16 %v1059, %v1057
  %v1156 = vpack.c.b16 %v1060, %v1058
  %v1157 = vpack.c.b16 %v1063, %v1061
  %v1158 = vpack.c.b16 %v1064, %v1062
  %v1159 = vpack.c.b16 %v1067, %v1065
  %v1160 = vpack.c.b16 %v1068, %v1066
  %v1161 = vpack.c.b16 %v1071, %v1069
  %v1162 = vpack.c.b16 %v1072, %v1070
  %v1163 = vpack.c.b16 %v1075, %v1073
  %v1164 = vpack.c.b16 %v1076, %v1074
  %v1165 = vpack.c.b16 %v1079, %v1077
  %v1166 = vpack.c.b16 %v1080, %v1078
  %v1167 = vpack.c.b16 %v1083, %v1081
  %v1168 = vpack.c.b16 %v1084, %v1082
  %v1169 = vpack.c.b16 %v1087, %v1085
  %v1170 = vpack.c.b16 %v1088, %v1086
  %v1171 = vpack.c.b16 %v1091, %v1089
  %v1172 = vpack.c.b16 %v1092, %v1090
  %v1173 = vpack.c.b16 %v1095, %v1093
  %v1174 = vpack.c.b16 %v1096, %v1094
  %v1175 = vpack.c.b16 %v1099, %v1097
  %v1176 = vpack.c.b16 %v1100, %v1098
  %v1177 = vpack.c.b16 %v1103, %v1101
  %v1178 = vpack.c.b16 %v1104, %v1102
  %v1179 = vpack.c.b16 %v1107, %v1105
  %v1180 = vpack.c.b16 %v1108, %v1106
  %v1181 = vpack.c.b16 %v1111, %v1109
  %v1182 = vpack.c.b16 %v1112, %v1110
  %v1183 = vpack.c.b16 %v1115, %v1113
  %v1184 = vpack.c.b16 %v1116, %v1114
  %v1185 = vpack.c.b16 %v1119, %v1117
  %v1186 = vpack.c.b16 %v1120, %v1118
  %v1187 = vpack.c.b16 %v1123, %v1121
  %v1188 = vpack.c.b16 %v1124, %v1122
  %1253 = vmatprep.subr.bf16.mxu0 %v1126
  %1254 = vmatpush1.bf16.msra.mxu0 %v1125
  %1255 = vmatprep.subr.bf16.mxu0 %v1128
  %1256 = vmatpush1.bf16.msra.mxu0 %v1127
  %1257 = vmatprep.subr.bf16.mxu0 %v1130
  %1258 = vmatpush1.bf16.msra.mxu0 %v1129
  %1259 = vmatprep.subr.bf16.mxu0 %v1132
  %1260 = vmatpush1.bf16.msra.mxu0 %v1131
  %1261 = vmatprep.subr.bf16.mxu0 %v1134
  %1262 = vmatpush1.bf16.msra.mxu0 %v1133
  %1263 = vmatprep.subr.bf16.mxu0 %v1136
  %1264 = vmatpush1.bf16.msra.mxu0 %v1135
  %1265 = vmatprep.subr.bf16.mxu0 %v1138
  %1266 = vmatpush1.bf16.msra.mxu0 %v1137
  %1267 = vmatprep.subr.bf16.mxu0 %v1140
  %1268 = vmatpush1.bf16.msra.mxu0 %v1139
  %1269 = vmatprep.subr.bf16.mxu0 %v1142
  %1270 = vmatpush1.bf16.msra.mxu0 %v1141
  %1271 = vmatprep.subr.bf16.mxu0 %v1144
  %1272 = vmatpush1.bf16.msra.mxu0 %v1143
  %1273 = vmatprep.subr.bf16.mxu0 %v1146
  %1274 = vmatpush1.bf16.msra.mxu0 %v1145
  %1275 = vmatprep.subr.bf16.mxu0 %v1148
  %1276 = vmatpush1.bf16.msra.mxu0 %v1147
  %1277 = vmatprep.subr.bf16.mxu0 %v1150
  %1278 = vmatpush1.bf16.msra.mxu0 %v1149
  %1279 = vmatprep.subr.bf16.mxu0 %v1152
  %1280 = vmatpush1.bf16.msra.mxu0 %v1151
  %1281 = vmatprep.subr.bf16.mxu0 %v1154
  %1282 = vmatpush1.bf16.msra.mxu0 %v1153
  %1283 = vmatprep.subr.bf16.mxu0 %v1156
  %1284 = vmatpush1.bf16.msra.mxu0 %v1155
  %1285 = vmatprep.mubr.bf16.mxu0 %v826
  %1286 = vmatmul.mubr.bf16.gmra.mrb[0].mxu0 %v825
  %v1287 = vpop.f32.mrb[0].mxu0
  %v1288 = vadd.f32 %v926, %v1287
  %v1289 = vpop.f32.mrb[0].mxu0
  %v1290 = vadd.f32 %v930, %v1289
  %v1291 = vpop.f32.mrb[0].mxu0
  %v1292 = vadd.f32 %v926, %v1291
  %v1293 = vpop.f32.mrb[0].mxu0
  %v1294 = vadd.f32 %v930, %v1293
  %1295 = vmatprep.mubr.bf16.mxu0 %v830
  %1296 = vmatmul.mubr.bf16.gmra.mrb[0].mxu0 %v829
  %v1297 = vpop.f32.mrb[0].mxu0
  %v1298 = vadd.f32 %v926, %v1297
  %v1299 = vpop.f32.mrb[0].mxu0
  %v1300 = vadd.f32 %v930, %v1299
  %v1301 = vpop.f32.mrb[0].mxu0
  %v1302 = vadd.f32 %v926, %v1301
  %v1303 = vpop.f32.mrb[0].mxu0
  %v1304 = vadd.f32 %v930, %v1303
  %1305 = vmatprep.mubr.bf16.mxu0 %v834
  %1306 = vmatmul.mubr.bf16.gmra.mrb[0].mxu0 %v833
  %v1307 = vpop.f32.mrb[0].mxu0
  %v1308 = vadd.f32 %v926, %v1307
  %v1309 = vpop.f32.mrb[0].mxu0
  %v1310 = vadd.f32 %v930, %v1309
  %v1311 = vpop.f32.mrb[0].mxu0
  %v1312 = vadd.f32 %v926, %v1311
  %v1313 = vpop.f32.mrb[0].mxu0
  %v1314 = vadd.f32 %v930, %v1313
  %1315 = vmatprep.mubr.bf16.mxu0 %v838
  %1316 = vmatmul.mubr.bf16.gmra.mrb[0].mxu0 %v837
  %v1317 = vpop.f32.mrb[0].mxu0
  %v1318 = vadd.f32 %v926, %v1317
  %v1319 = vpop.f32.mrb[0].mxu0
  %v1320 = vadd.f32 %v930, %v1319
  %v1321 = vpop.f32.mrb[0].mxu0
  %v1322 = vadd.f32 %v926, %v1321
  %v1323 = vpop.f32.mrb[0].mxu0
  %v1324 = vadd.f32 %v930, %v1323
  %1325 = vmatprep.mubr.bf16.mxu0 %v842
  %1326 = vmatmul.mubr.bf16.gmra.mrb[0].mxu0 %v841
  %v1327 = vpop.f32.mrb[0].mxu0
  %v1328 = vadd.f32 %v926, %v1327
  %v1329 = vpop.f32.mrb[0].mxu0
  %v1330 = vadd.f32 %v930, %v1329
  %v1331 = vpop.f32.mrb[0].mxu0
  %v1332 = vadd.f32 %v926, %v1331
  %v1333 = vpop.f32.mrb[0].mxu0
  %v1334 = vadd.f32 %v930, %v1333
  %1335 = vmatprep.mubr.bf16.mxu0 %v846
  %1336 = vmatmul.mubr.bf16.gmra.mrb[0].mxu0 %v845
  %v1337 = vpop.f32.mrb[0].mxu0
  %v1338 = vadd.f32 %v926, %v1337
  %v1339 = vpop.f32.mrb[0].mxu0
  %v1340 = vadd.f32 %v930, %v1339
  %v1341 = vpop.f32.mrb[0].mxu0
  %v1342 = vadd.f32 %v926, %v1341
  %v1343 = vpop.f32.mrb[0].mxu0
  %v1344 = vadd.f32 %v930, %v1343
  %1345 = vmatprep.mubr.bf16.mxu0 %v850
  %1346 = vmatmul.mubr.bf16.gmra.mrb[0].mxu0 %v849
  %v1347 = vpop.f32.mrb[0].mxu0
  %v1348 = vadd.f32 %v926, %v1347
  %v1349 = vpop.f32.mrb[0].mxu0
  %v1350 = vadd.f32 %v930, %v1349
  %v1351 = vpop.f32.mrb[0].mxu0
  %v1352 = vadd.f32 %v926, %v1351
  %v1353 = vpop.f32.mrb[0].mxu0
  %v1354 = vadd.f32 %v930, %v1353
  %1355 = vmatprep.mubr.bf16.mxu0 %v854
  %1356 = vmatmul.mubr.bf16.gmra.mrb[0].mxu0 %v853
  %v1357 = vpop.f32.mrb[0].mxu0
  %v1358 = vadd.f32 %v926, %v1357
  %v1359 = vpop.f32.mrb[0].mxu0
  %v1360 = vadd.f32 %v930, %v1359
  %v1361 = vpop.f32.mrb[0].mxu0
  %v1362 = vadd.f32 %v926, %v1361
  %v1363 = vpop.f32.mrb[0].mxu0
  %v1364 = vadd.f32 %v930, %v1363
  %1365 = vdwg.mxu0
  %1366 = vmatprep.subr.bf16.mxu0 %v1158
  %1367 = vmatpush1.bf16.msra.mxu0 %v1157
  %1368 = vmatprep.subr.bf16.mxu0 %v1160
  %1369 = vmatpush1.bf16.msra.mxu0 %v1159
  %1370 = vmatprep.subr.bf16.mxu0 %v1162
  %1371 = vmatpush1.bf16.msra.mxu0 %v1161
  %1372 = vmatprep.subr.bf16.mxu0 %v1164
  %1373 = vmatpush1.bf16.msra.mxu0 %v1163
  %1374 = vmatprep.subr.bf16.mxu0 %v1166
  %1375 = vmatpush1.bf16.msra.mxu0 %v1165
  %1376 = vmatprep.subr.bf16.mxu0 %v1168
  %1377 = vmatpush1.bf16.msra.mxu0 %v1167
  %1378 = vmatprep.subr.bf16.mxu0 %v1170
  %1379 = vmatpush1.bf16.msra.mxu0 %v1169
  %1380 = vmatprep.subr.bf16.mxu0 %v1172
  %1381 = vmatpush1.bf16.msra.mxu0 %v1171
  %1382 = vmatprep.subr.bf16.mxu0 %v1174
  %1383 = vmatpush1.bf16.msra.mxu0 %v1173
  %1384 = vmatprep.subr.bf16.mxu0 %v1176
  %1385 = vmatpush1.bf16.msra.mxu0 %v1175
  %1386 = vmatprep.subr.bf16.mxu0 %v1178
  %1387 = vmatpush1.bf16.msra.mxu0 %v1177
  %1388 = vmatprep.subr.bf16.mxu0 %v1180
  %1389 = vmatpush1.bf16.msra.mxu0 %v1179
  %1390 = vmatprep.subr.bf16.mxu0 %v1182
  %1391 = vmatpush1.bf16.msra.mxu0 %v1181
  %1392 = vmatprep.subr.bf16.mxu0 %v1184
  %1393 = vmatpush1.bf16.msra.mxu0 %v1183
  %1394 = vmatprep.subr.bf16.mxu0 %v1186
  %1395 = vmatpush1.bf16.msra.mxu0 %v1185
  %1396 = vmatprep.subr.bf16.mxu0 %v1188
  %1397 = vmatpush1.bf16.msra.mxu0 %v1187
  %1398 = vmatprep.mubr.bf16.mxu0 %v828
  %1399 = vmatmul.mubr.bf16.gmra.mrb[0].mxu0 %v827
  %v1400 = vpop.f32.mrb[0].mxu0
  %v1401 = vadd.f32 %v1288, %v1400
  %v1402 = vpop.f32.mrb[0].mxu0
  %v1403 = vadd.f32 %v1290, %v1402
  %v1404 = vpop.f32.mrb[0].mxu0
  %v1405 = vadd.f32 %v1292, %v1404
  %v1406 = vpop.f32.mrb[0].mxu0
  %v1407 = vadd.f32 %v1294, %v1406
  %1408 = vmatprep.mubr.bf16.mxu0 %v832
  %1409 = vmatmul.mubr.bf16.gmra.mrb[0].mxu0 %v831
  %v1410 = vpop.f32.mrb[0].mxu0
  %v1411 = vadd.f32 %v1298, %v1410
  %v1412 = vpop.f32.mrb[0].mxu0
  %v1413 = vadd.f32 %v1300, %v1412
  %v1414 = vpop.f32.mrb[0].mxu0
  %v1415 = vadd.f32 %v1302, %v1414
  %v1416 = vpop.f32.mrb[0].mxu0
  %v1417 = vadd.f32 %v1304, %v1416
  %1418 = vmatprep.mubr.bf16.mxu0 %v836
  %1419 = vmatmul.mubr.bf16.gmra.mrb[0].mxu0 %v835
  %v1420 = vpop.f32.mrb[0].mxu0
  %v1421 = vadd.f32 %v1308, %v1420
  %v1422 = vpop.f32.mrb[0].mxu0
  %v1423 = vadd.f32 %v1310, %v1422
  %v1424 = vpop.f32.mrb[0].mxu0
  %v1425 = vadd.f32 %v1312, %v1424
  %v1426 = vpop.f32.mrb[0].mxu0
  %v1427 = vadd.f32 %v1314, %v1426
  %1428 = vmatprep.mubr.bf16.mxu0 %v840
  %1429 = vmatmul.mubr.bf16.gmra.mrb[0].mxu0 %v839
  %v1430 = vpop.f32.mrb[0].mxu0
  %v1431 = vadd.f32 %v1318, %v1430
  %v1432 = vpop.f32.mrb[0].mxu0
  %v1433 = vadd.f32 %v1320, %v1432
  %v1434 = vpop.f32.mrb[0].mxu0
  %v1435 = vadd.f32 %v1322, %v1434
  %v1436 = vpop.f32.mrb[0].mxu0
  %v1437 = vadd.f32 %v1324, %v1436
  %1438 = vmatprep.mubr.bf16.mxu0 %v844
  %1439 = vmatmul.mubr.bf16.gmra.mrb[0].mxu0 %v843
  %v1440 = vpop.f32.mrb[0].mxu0
  %v1441 = vadd.f32 %v1328, %v1440
  %v1442 = vpop.f32.mrb[0].mxu0
  %v1443 = vadd.f32 %v1330, %v1442
  %v1444 = vpop.f32.mrb[0].mxu0
  %v1445 = vadd.f32 %v1332, %v1444
  %v1446 = vpop.f32.mrb[0].mxu0
  %v1447 = vadd.f32 %v1334, %v1446
  %1448 = vmatprep.mubr.bf16.mxu0 %v848
  %1449 = vmatmul.mubr.bf16.gmra.mrb[0].mxu0 %v847
  %v1450 = vpop.f32.mrb[0].mxu0
  %v1451 = vadd.f32 %v1338, %v1450
  %v1452 = vpop.f32.mrb[0].mxu0
  %v1453 = vadd.f32 %v1340, %v1452
  %v1454 = vpop.f32.mrb[0].mxu0
  %v1455 = vadd.f32 %v1342, %v1454
  %v1456 = vpop.f32.mrb[0].mxu0
  %v1457 = vadd.f32 %v1344, %v1456
  %1458 = vmatprep.mubr.bf16.mxu0 %v852
  %1459 = vmatmul.mubr.bf16.gmra.mrb[0].mxu0 %v851
  %v1460 = vpop.f32.mrb[0].mxu0
  %v1461 = vadd.f32 %v1348, %v1460
  %v1462 = vpop.f32.mrb[0].mxu0
  %v1463 = vadd.f32 %v1350, %v1462
  %v1464 = vpop.f32.mrb[0].mxu0
  %v1465 = vadd.f32 %v1352, %v1464
  %v1466 = vpop.f32.mrb[0].mxu0
  %v1467 = vadd.f32 %v1354, %v1466
  %1468 = vmatprep.mubr.bf16.mxu0 %v856
  %1469 = vmatmul.mubr.bf16.gmra.mrb[0].mxu0 %v855
  %v1470 = vpop.f32.mrb[0].mxu0
  %v1471 = vadd.f32 %v1358, %v1470
  %v1472 = vpop.f32.mrb[0].mxu0
  %v1473 = vadd.f32 %v1360, %v1472
  %v1474 = vpop.f32.mrb[0].mxu0
  %v1475 = vadd.f32 %v1362, %v1474
  %v1476 = vpop.f32.mrb[0].mxu0
  %v1477 = vadd.f32 %v1364, %v1476
  %1478 = vdwg.mxu0
  %v1479 = vmax.f32 %v1401, 0.0
  %v1480 = vmax.f32 %v1403, 0.0
  %v1481 = vmax.f32 %v1405, 0.0
  %v1482 = vmax.f32 %v1407, 0.0
  %v1483 = vmax.f32 %v1411, 0.0
  %v1484 = vmax.f32 %v1413, 0.0
  %v1485 = vmax.f32 %v1415, 0.0
  %v1486 = vmax.f32 %v1417, 0.0
  %v1487 = vmax.f32 %v1421, 0.0
  %v1488 = vmax.f32 %v1423, 0.0
  %v1489 = vmax.f32 %v1425, 0.0
  %v1490 = vmax.f32 %v1427, 0.0
  %v1491 = vmax.f32 %v1431, 0.0
  %v1492 = vmax.f32 %v1433, 0.0
  %v1493 = vmax.f32 %v1435, 0.0
  %v1494 = vmax.f32 %v1437, 0.0
  %v1495 = vmax.f32 %v1441, 0.0
  %v1496 = vmax.f32 %v1443, 0.0
  %v1497 = vmax.f32 %v1445, 0.0
  %v1498 = vmax.f32 %v1447, 0.0
  %v1499 = vmax.f32 %v1451, 0.0
  %v1500 = vmax.f32 %v1453, 0.0
  %v1501 = vmax.f32 %v1455, 0.0
  %v1502 = vmax.f32 %v1457, 0.0
  %v1503 = vmax.f32 %v1461, 0.0
  %v1504 = vmax.f32 %v1463, 0.0
  %v1505 = vmax.f32 %v1465, 0.0
  %v1506 = vmax.f32 %v1467, 0.0
  %v1507 = vmax.f32 %v1471, 0.0
  %v1508 = vmax.f32 %v1473, 0.0
  %v1509 = vmax.f32 %v1475, 0.0
  %v1510 = vmax.f32 %v1477, 0.0
  %v1511 = vpack.c.bf16 %v1481, %v1479
  %v1512 = vpack.c.bf16 %v1482, %v1480
  %v1513 = vpack.c.bf16 %v1485, %v1483
  %v1514 = vpack.c.bf16 %v1486, %v1484
  %v1515 = vpack.c.bf16 %v1489, %v1487
  %v1516 = vpack.c.bf16 %v1490, %v1488
  %v1517 = vpack.c.bf16 %v1493, %v1491
  %v1518 = vpack.c.bf16 %v1494, %v1492
  %v1519 = vpack.c.bf16 %v1497, %v1495
  %v1520 = vpack.c.bf16 %v1498, %v1496
  %v1521 = vpack.c.bf16 %v1501, %v1499
  %v1522 = vpack.c.bf16 %v1502, %v1500
  %v1523 = vpack.c.bf16 %v1505, %v1503
  %v1524 = vpack.c.bf16 %v1506, %v1504
  %v1525 = vpack.c.bf16 %v1509, %v1507
  %v1526 = vpack.c.bf16 %v1510, %v1508
  %v1527 = vld [vmem:[%s5] sm:$0xf]
  %v1528 = vld [vmem:[%s5 + $0x4] sm:$0xf]
  %v1529 = vld [vmem:[%s5 + $0x8] sm:$0xf]
  %v1530 = vld [vmem:[%s5 + $0xc] sm:$0xf]
  %v1531 = vld [vmem:[%s5 + $0x10] sm:$0xf]
  %v1532 = vld [vmem:[%s5 + $0x14] sm:$0xf]
  %v1533 = vld [vmem:[%s5 + $0x18] sm:$0xf]
  %v1534 = vld [vmem:[%s5 + $0x1c] sm:$0xf]
  %v1535 = vld [vmem:[%s5 + $0x20] sm:$0xf]
  %v1536 = vld [vmem:[%s5 + $0x24] sm:$0xf]
  %v1537 = vld [vmem:[%s5 + $0x28] sm:$0xf]
  %v1538 = vld [vmem:[%s5 + $0x2c] sm:$0xf]
  %v1539 = vld [vmem:[%s5 + $0x30] sm:$0xf]
  %v1540 = vld [vmem:[%s5 + $0x34] sm:$0xf]
  %v1541 = vld [vmem:[%s5 + $0x38] sm:$0xf]
  %v1542 = vld [vmem:[%s5 + $0x3c] sm:$0xf]
  %v1543 = vld [vmem:[%s5 + $0x40] sm:$0xf]
  %v1544 = vld [vmem:[%s5 + $0x44] sm:$0xf]
  %v1545 = vld [vmem:[%s5 + $0x48] sm:$0xf]
  %v1546 = vld [vmem:[%s5 + $0x4c] sm:$0xf]
  %v1547 = vld [vmem:[%s5 + $0x50] sm:$0xf]
  %v1548 = vld [vmem:[%s5 + $0x54] sm:$0xf]
  %v1549 = vld [vmem:[%s5 + $0x58] sm:$0xf]
  %v1550 = vld [vmem:[%s5 + $0x5c] sm:$0xf]
  %v1551 = vld [vmem:[%s5 + $0x60] sm:$0xf]
  %v1552 = vld [vmem:[%s5 + $0x64] sm:$0xf]
  %v1553 = vld [vmem:[%s5 + $0x68] sm:$0xf]
  %v1554 = vld [vmem:[%s5 + $0x6c] sm:$0xf]
  %v1555 = vld [vmem:[%s5 + $0x70] sm:$0xf]
  %v1556 = vld [vmem:[%s5 + $0x74] sm:$0xf]
  %v1557 = vld [vmem:[%s5 + $0x78] sm:$0xf]
  %v1558 = vld [vmem:[%s5 + $0x7c] sm:$0xf]
  %v1559 = vld [vmem:[%s6] sm:$0x1]
  %v1561 = vlaneseq
  %v1562 = vshrl.u32 %v1561, 7
  %v1563 = vsub.s32 0, %v1562
  %v1564 = vrot.slane %v1559, %v1563
  %v1598 = vunpack.c.l.b16 %v1527
  %v1599 = vunpack.c.l.b16 %v1528
  %v1600 = vunpack.c.l.b16 %v1529
  %v1601 = vunpack.c.l.b16 %v1530
  %v1602 = vunpack.c.l.b16 %v1531
  %v1603 = vunpack.c.l.b16 %v1532
  %v1604 = vunpack.c.l.b16 %v1533
  %v1605 = vunpack.c.l.b16 %v1534
  %v1606 = vunpack.c.l.b16 %v1535
  %v1607 = vunpack.c.l.b16 %v1536
  %v1608 = vunpack.c.l.b16 %v1537
  %v1609 = vunpack.c.l.b16 %v1538
  %v1610 = vunpack.c.l.b16 %v1539
  %v1611 = vunpack.c.l.b16 %v1540
  %v1612 = vunpack.c.l.b16 %v1541
  %v1613 = vunpack.c.l.b16 %v1542
  %v1614 = vunpack.c.l.b16 %v1543
  %v1615 = vunpack.c.l.b16 %v1544
  %v1616 = vunpack.c.l.b16 %v1545
  %v1617 = vunpack.c.l.b16 %v1546
  %v1618 = vunpack.c.l.b16 %v1547
  %v1619 = vunpack.c.l.b16 %v1548
  %v1620 = vunpack.c.l.b16 %v1549
  %v1621 = vunpack.c.l.b16 %v1550
  %v1622 = vunpack.c.l.b16 %v1551
  %v1623 = vunpack.c.l.b16 %v1552
  %v1624 = vunpack.c.l.b16 %v1553
  %v1625 = vunpack.c.l.b16 %v1554
  %v1626 = vunpack.c.l.b16 %v1555
  %v1627 = vunpack.c.l.b16 %v1556
  %v1628 = vunpack.c.l.b16 %v1557
  %v1629 = vunpack.c.l.b16 %v1558
  %v1630 = vpack.c.b16 %v1599, %v1598
  %v1631 = vpack.c.b16 %v1601, %v1600
  %v1632 = vpack.c.b16 %v1603, %v1602
  %v1633 = vpack.c.b16 %v1605, %v1604
  %v1634 = vpack.c.b16 %v1607, %v1606
  %v1635 = vpack.c.b16 %v1609, %v1608
  %v1636 = vpack.c.b16 %v1611, %v1610
  %v1637 = vpack.c.b16 %v1613, %v1612
  %v1638 = vpack.c.b16 %v1615, %v1614
  %v1639 = vpack.c.b16 %v1617, %v1616
  %v1640 = vpack.c.b16 %v1619, %v1618
  %v1641 = vpack.c.b16 %v1621, %v1620
  %v1642 = vpack.c.b16 %v1623, %v1622
  %v1643 = vpack.c.b16 %v1625, %v1624
  %v1644 = vpack.c.b16 %v1627, %v1626
  %v1645 = vpack.c.b16 %v1629, %v1628
  %1662 = vmatprep.subr.bf16.mxu0 0
  %1663 = vmatpush1.bf16.msra.mxu0 %v1630
  %1664 = vmatprep.subr.bf16.mxu0 0
  %1665 = vmatpush1.bf16.msra.mxu0 %v1631
  %1666 = vmatprep.subr.bf16.mxu0 0
  %1667 = vmatpush1.bf16.msra.mxu0 %v1632
  %1668 = vmatprep.subr.bf16.mxu0 0
  %1669 = vmatpush1.bf16.msra.mxu0 %v1633
  %1670 = vmatprep.subr.bf16.mxu0 0
  %1671 = vmatpush1.bf16.msra.mxu0 %v1634
  %1672 = vmatprep.subr.bf16.mxu0 0
  %1673 = vmatpush1.bf16.msra.mxu0 %v1635
  %1674 = vmatprep.subr.bf16.mxu0 0
  %1675 = vmatpush1.bf16.msra.mxu0 %v1636
  %1676 = vmatprep.subr.bf16.mxu0 0
  %1677 = vmatpush1.bf16.msra.mxu0 %v1637
  %1678 = vmatprep.subr.bf16.mxu0 0
  %1679 = vmatpush1.bf16.msra.mxu0 %v1638
  %1680 = vmatprep.subr.bf16.mxu0 0
  %1681 = vmatpush1.bf16.msra.mxu0 %v1639
  %1682 = vmatprep.subr.bf16.mxu0 0
  %1683 = vmatpush1.bf16.msra.mxu0 %v1640
  %1684 = vmatprep.subr.bf16.mxu0 0
  %1685 = vmatpush1.bf16.msra.mxu0 %v1641
  %1686 = vmatprep.subr.bf16.mxu0 0
  %1687 = vmatpush1.bf16.msra.mxu0 %v1642
  %1688 = vmatprep.subr.bf16.mxu0 0
  %1689 = vmatpush1.bf16.msra.mxu0 %v1643
  %1690 = vmatprep.subr.bf16.mxu0 0
  %1691 = vmatpush1.bf16.msra.mxu0 %v1644
  %1692 = vmatprep.subr.bf16.mxu0 0
  %1693 = vmatpush1.bf16.msra.mxu0 %v1645
  %1694 = vmatprep.mubr.bf16.mxu0 %v1512
  %1695 = vmatmul.mubr.bf16.gmra.mrb[0].mxu0 %v1511
  %v1696 = vpop.f32.mrb[0].mxu0
  %v1697 = vadd.f32 %v1564, %v1696
  %v1698 = vpop.f32.mrb[0].mxu0
  %v1699 = vpop.f32.mrb[0].mxu0
  %v1700 = vadd.f32 %v1564, %v1699
  %v1701 = vpop.f32.mrb[0].mxu0
  %1702 = vmatprep.mubr.bf16.mxu0 %v1514
  %1703 = vmatmul.mubr.bf16.gmra.mrb[0].mxu0 %v1513
  %v1704 = vpop.f32.mrb[0].mxu0
  %v1705 = vadd.f32 %v1564, %v1704
  %v1706 = vpop.f32.mrb[0].mxu0
  %v1707 = vpop.f32.mrb[0].mxu0
  %v1708 = vadd.f32 %v1564, %v1707
  %v1709 = vpop.f32.mrb[0].mxu0
  %1710 = vmatprep.mubr.bf16.mxu0 %v1516
  %1711 = vmatmul.mubr.bf16.gmra.mrb[0].mxu0 %v1515
  %v1712 = vpop.f32.mrb[0].mxu0
  %v1713 = vadd.f32 %v1564, %v1712
  %v1714 = vpop.f32.mrb[0].mxu0
  %v1715 = vpop.f32.mrb[0].mxu0
  %v1716 = vadd.f32 %v1564, %v1715
  %v1717 = vpop.f32.mrb[0].mxu0
  %1718 = vmatprep.mubr.bf16.mxu0 %v1518
  %1719 = vmatmul.mubr.bf16.gmra.mrb[0].mxu0 %v1517
  %v1720 = vpop.f32.mrb[0].mxu0
  %v1721 = vadd.f32 %v1564, %v1720
  %v1722 = vpop.f32.mrb[0].mxu0
  %v1723 = vpop.f32.mrb[0].mxu0
  %v1724 = vadd.f32 %v1564, %v1723
  %v1725 = vpop.f32.mrb[0].mxu0
  %1726 = vmatprep.mubr.bf16.mxu0 %v1520
  %1727 = vmatmul.mubr.bf16.gmra.mrb[0].mxu0 %v1519
  %v1728 = vpop.f32.mrb[0].mxu0
  %v1729 = vadd.f32 %v1564, %v1728
  %v1730 = vpop.f32.mrb[0].mxu0
  %v1731 = vpop.f32.mrb[0].mxu0
  %v1732 = vadd.f32 %v1564, %v1731
  %v1733 = vpop.f32.mrb[0].mxu0
  %1734 = vmatprep.mubr.bf16.mxu0 %v1522
  %1735 = vmatmul.mubr.bf16.gmra.mrb[0].mxu0 %v1521
  %v1736 = vpop.f32.mrb[0].mxu0
  %v1737 = vadd.f32 %v1564, %v1736
  %v1738 = vpop.f32.mrb[0].mxu0
  %v1739 = vpop.f32.mrb[0].mxu0
  %v1740 = vadd.f32 %v1564, %v1739
  %v1741 = vpop.f32.mrb[0].mxu0
  %1742 = vmatprep.mubr.bf16.mxu0 %v1524
  %1743 = vmatmul.mubr.bf16.gmra.mrb[0].mxu0 %v1523
  %v1744 = vpop.f32.mrb[0].mxu0
  %v1745 = vadd.f32 %v1564, %v1744
  %v1746 = vpop.f32.mrb[0].mxu0
  %v1747 = vpop.f32.mrb[0].mxu0
  %v1748 = vadd.f32 %v1564, %v1747
  %v1749 = vpop.f32.mrb[0].mxu0
  %1750 = vmatprep.mubr.bf16.mxu0 %v1526
  %1751 = vmatmul.mubr.bf16.gmra.mrb[0].mxu0 %v1525
  %v1752 = vpop.f32.mrb[0].mxu0
  %v1753 = vadd.f32 %v1564, %v1752
  %v1754 = vpop.f32.mrb[0].mxu0
  %v1755 = vpop.f32.mrb[0].mxu0
  %v1756 = vadd.f32 %v1564, %v1755
  %v1757 = vpop.f32.mrb[0].mxu0
  %1758 = vdwg.mxu0
  %v1759 = vmax.f32 %v1697, 0.0
  %v1760 = vmax.f32 %v1700, 0.0
  %v1761 = vmax.f32 %v1705, 0.0
  %v1762 = vmax.f32 %v1708, 0.0
  %v1763 = vmax.f32 %v1713, 0.0
  %v1764 = vmax.f32 %v1716, 0.0
  %v1765 = vmax.f32 %v1721, 0.0
  %v1766 = vmax.f32 %v1724, 0.0
  %v1767 = vmax.f32 %v1729, 0.0
  %v1768 = vmax.f32 %v1732, 0.0
  %v1769 = vmax.f32 %v1737, 0.0
  %v1770 = vmax.f32 %v1740, 0.0
  %v1771 = vmax.f32 %v1745, 0.0
  %v1772 = vmax.f32 %v1748, 0.0
  %v1773 = vmax.f32 %v1753, 0.0
  %v1774 = vmax.f32 %v1756, 0.0
  %v1775 = vpack.c.bf16 %v1760, %v1759
  %v1776 = vpack.c.bf16 %v1762, %v1761
  %v1777 = vpack.c.bf16 %v1764, %v1763
  %v1778 = vpack.c.bf16 %v1766, %v1765
  %v1779 = vpack.c.bf16 %v1768, %v1767
  %v1780 = vpack.c.bf16 %v1770, %v1769
  %v1781 = vpack.c.bf16 %v1772, %v1771
  %v1782 = vpack.c.bf16 %v1774, %v1773
  %v1783 = vld [vmem:[%s7] sm:$0xf]
  %v1784 = vld [vmem:[%s7 + $0x4] sm:$0xf]
  %v1785 = vld [vmem:[%s7 + $0x8] sm:$0xf]
  %v1786 = vld [vmem:[%s7 + $0xc] sm:$0xf]
  %v1787 = vld [vmem:[%s7 + $0x10] sm:$0xf]
  %v1788 = vld [vmem:[%s7 + $0x14] sm:$0xf]
  %v1789 = vld [vmem:[%s7 + $0x18] sm:$0xf]
  %v1790 = vld [vmem:[%s7 + $0x1c] sm:$0xf]
  %v1791 = vld [vmem:[%s7 + $0x20] sm:$0xf]
  %v1792 = vld [vmem:[%s7 + $0x24] sm:$0xf]
  %v1793 = vld [vmem:[%s7 + $0x28] sm:$0xf]
  %v1794 = vld [vmem:[%s7 + $0x2c] sm:$0xf]
  %v1795 = vld [vmem:[%s7 + $0x30] sm:$0xf]
  %v1796 = vld [vmem:[%s7 + $0x34] sm:$0xf]
  %v1797 = vld [vmem:[%s7 + $0x38] sm:$0xf]
  %v1798 = vld [vmem:[%s7 + $0x3c] sm:$0xf]
  %v1799 = vld [vmem:[%s8] sm:$0x1]
  %v1801 = vlaneseq
  %v1802 = vshrl.u32 %v1801, 7
  %v1803 = vsub.s32 0, %v1802
  %v1804 = vrot.slane %v1799, %v1803
  %v1822 = vunpack.c.l.b16 %v1783
  %v1823 = vunpack.c.l.b16 %v1784
  %v1824 = vunpack.c.l.b16 %v1785
  %v1825 = vunpack.c.l.b16 %v1786
  %v1826 = vunpack.c.l.b16 %v1787
  %v1827 = vunpack.c.l.b16 %v1788
  %v1828 = vunpack.c.l.b16 %v1789
  %v1829 = vunpack.c.l.b16 %v1790
  %v1830 = vunpack.c.l.b16 %v1791
  %v1831 = vunpack.c.l.b16 %v1792
  %v1832 = vunpack.c.l.b16 %v1793
  %v1833 = vunpack.c.l.b16 %v1794
  %v1834 = vunpack.c.l.b16 %v1795
  %v1835 = vunpack.c.l.b16 %v1796
  %v1836 = vunpack.c.l.b16 %v1797
  %v1837 = vunpack.c.l.b16 %v1798
  %v1838 = vpack.c.b16 %v1823, %v1822
  %v1839 = vpack.c.b16 %v1825, %v1824
  %v1840 = vpack.c.b16 %v1827, %v1826
  %v1841 = vpack.c.b16 %v1829, %v1828
  %v1842 = vpack.c.b16 %v1831, %v1830
  %v1843 = vpack.c.b16 %v1833, %v1832
  %v1844 = vpack.c.b16 %v1835, %v1834
  %v1845 = vpack.c.b16 %v1837, %v1836
  %1854 = vmatprep.subr.bf16.mxu0 0
  %1855 = vmatpush1.bf16.msra.mxu0 %v1838
  %1856 = vmatprep.subr.bf16.mxu0 0
  %1857 = vmatpush1.bf16.msra.mxu0 %v1839
  %1858 = vmatprep.subr.bf16.mxu0 0
  %1859 = vmatpush1.bf16.msra.mxu0 %v1840
  %1860 = vmatprep.subr.bf16.mxu0 0
  %1861 = vmatpush1.bf16.msra.mxu0 %v1841
  %1862 = vmatprep.subr.bf16.mxu0 0
  %1863 = vmatpush1.bf16.msra.mxu0 %v1842
  %1864 = vmatprep.subr.bf16.mxu0 0
  %1865 = vmatpush1.bf16.msra.mxu0 %v1843
  %1866 = vmatprep.subr.bf16.mxu0 0
  %1867 = vmatpush1.bf16.msra.mxu0 %v1844
  %1868 = vmatprep.subr.bf16.mxu0 0
  %1869 = vmatpush1.bf16.msra.mxu0 %v1845
  %1870 = vmatprep.subr.bf16.mxu0 0
  %1871 = vmatpush1.bf16.msra.mxu0 0
  %1872 = vmatprep.subr.bf16.mxu0 0
  %1873 = vmatpush1.bf16.msra.mxu0 0
  %1874 = vmatprep.subr.bf16.mxu0 0
  %1875 = vmatpush1.bf16.msra.mxu0 0
  %1876 = vmatprep.subr.bf16.mxu0 0
  %1877 = vmatpush1.bf16.msra.mxu0 0
  %1878 = vmatprep.subr.bf16.mxu0 0
  %1879 = vmatpush1.bf16.msra.mxu0 0
  %1880 = vmatprep.subr.bf16.mxu0 0
  %1881 = vmatpush1.bf16.msra.mxu0 0
  %1882 = vmatprep.subr.bf16.mxu0 0
  %1883 = vmatpush1.bf16.msra.mxu0 0
  %1884 = vmatprep.subr.bf16.mxu0 0
  %1885 = vmatpush1.bf16.msra.mxu0 0
  %1886 = vmatprep.mubr.bf16.mxu0 0
  %1887 = vmatmul.mubr.bf16.gmra.mrb[0].mxu0 %v1775
  %v1888 = vpop.f32.mrb[0].mxu0
  %v1889 = vadd.f32 %v1804, %v1888
  %v1890 = vpop.f32.mrb[0].mxu0
  %v1891 = vpop.f32.mrb[0].mxu0
  %v1892 = vadd.f32 %v1804, %v1891
  %v1893 = vpop.f32.mrb[0].mxu0
  %1894 = vmatprep.mubr.bf16.mxu0 0
  %1895 = vmatmul.mubr.bf16.gmra.mrb[0].mxu0 %v1776
  %v1896 = vpop.f32.mrb[0].mxu0
  %v1897 = vadd.f32 %v1804, %v1896
  %v1898 = vpop.f32.mrb[0].mxu0
  %v1899 = vpop.f32.mrb[0].mxu0
  %v1900 = vadd.f32 %v1804, %v1899
  %v1901 = vpop.f32.mrb[0].mxu0
  %1902 = vmatprep.mubr.bf16.mxu0 0
  %1903 = vmatmul.mubr.bf16.gmra.mrb[0].mxu0 %v1777
  %v1904 = vpop.f32.mrb[0].mxu0
  %v1905 = vadd.f32 %v1804, %v1904
  %v1906 = vpop.f32.mrb[0].mxu0
  %v1907 = vpop.f32.mrb[0].mxu0
  %v1908 = vadd.f32 %v1804, %v1907
  %v1909 = vpop.f32.mrb[0].mxu0
  %1910 = vmatprep.mubr.bf16.mxu0 0
  %1911 = vmatmul.mubr.bf16.gmra.mrb[0].mxu0 %v1778
  %v1912 = vpop.f32.mrb[0].mxu0
  %v1913 = vadd.f32 %v1804, %v1912
  %v1914 = vpop.f32.mrb[0].mxu0
  %v1915 = vpop.f32.mrb[0].mxu0
  %v1916 = vadd.f32 %v1804, %v1915
  %v1917 = vpop.f32.mrb[0].mxu0
  %1918 = vmatprep.mubr.bf16.mxu0 0
  %1919 = vmatmul.mubr.bf16.gmra.mrb[0].mxu0 %v1779
  %v1920 = vpop.f32.mrb[0].mxu0
  %v1921 = vadd.f32 %v1804, %v1920
  %v1922 = vpop.f32.mrb[0].mxu0
  %v1923 = vpop.f32.mrb[0].mxu0
  %v1924 = vadd.f32 %v1804, %v1923
  %v1925 = vpop.f32.mrb[0].mxu0
  %1926 = vmatprep.mubr.bf16.mxu0 0
  %1927 = vmatmul.mubr.bf16.gmra.mrb[0].mxu0 %v1780
  %v1928 = vpop.f32.mrb[0].mxu0
  %v1929 = vadd.f32 %v1804, %v1928
  %v1930 = vpop.f32.mrb[0].mxu0
  %v1931 = vpop.f32.mrb[0].mxu0
  %v1932 = vadd.f32 %v1804, %v1931
  %v1933 = vpop.f32.mrb[0].mxu0
  %1934 = vmatprep.mubr.bf16.mxu0 0
  %1935 = vmatmul.mubr.bf16.gmra.mrb[0].mxu0 %v1781
  %v1936 = vpop.f32.mrb[0].mxu0
  %v1937 = vadd.f32 %v1804, %v1936
  %v1938 = vpop.f32.mrb[0].mxu0
  %v1939 = vpop.f32.mrb[0].mxu0
  %v1940 = vadd.f32 %v1804, %v1939
  %v1941 = vpop.f32.mrb[0].mxu0
  %1942 = vmatprep.mubr.bf16.mxu0 0
  %1943 = vmatmul.mubr.bf16.gmra.mrb[0].mxu0 %v1782
  %v1944 = vpop.f32.mrb[0].mxu0
  %v1945 = vadd.f32 %v1804, %v1944
  %v1946 = vpop.f32.mrb[0].mxu0
  %v1947 = vpop.f32.mrb[0].mxu0
  %v1948 = vadd.f32 %v1804, %v1947
  %v1949 = vpop.f32.mrb[0].mxu0
  %1950 = vdwg.mxu0
  %1951 = vst [vmem:[%s9] sm:$0xff] %v1889
  %1952 = vst [vmem:[%s9 + $0x8] sm:$0xff] %v1892
  %1953 = vst [vmem:[%s9 + $0x10] sm:$0xff] %v1897
  %1954 = vst [vmem:[%s9 + $0x18] sm:$0xff] %v1900
  %1955 = vst [vmem:[%s9 + $0x20] sm:$0xff] %v1905
  %1956 = vst [vmem:[%s9 + $0x28] sm:$0xff] %v1908
  %1957 = vst [vmem:[%s9 + $0x30] sm:$0xff] %v1913
  %1958 = vst [vmem:[%s9 + $0x38] sm:$0xff] %v1916
  %1959 = vst [vmem:[%s9 + $0x40] sm:$0xff] %v1921
  %1960 = vst [vmem:[%s9 + $0x48] sm:$0xff] %v1924
  %1961 = vst [vmem:[%s9 + $0x50] sm:$0xff] %v1929
  %1962 = vst [vmem:[%s9 + $0x58] sm:$0xff] %v1932
  %1963 = vst [vmem:[%s9 + $0x60] sm:$0xff] %v1937
  %1964 = vst [vmem:[%s9 + $0x68] sm:$0xff] %v1940
  %1965 = vst [vmem:[%s9 + $0x70] sm:$0xff] %v1945
  %1966 = vst [vmem:[%s9 + $0x78] sm:$0xff] %v1948
  // Predicated region
  $region38: #{fc_discriminator_forward.1} parent=0 // pred_check
    _
  $region39: #{fc_discriminator_forward.1} parent=0 // pred_check_branch
    %1968 = sbr.rel (0) target = $region41
  $region40: #{fc_discriminator_forward.1} parent=0 // pred_region
    _
  $region41: #{fc_discriminator_forward.1} parent=0 // pred_fallthru
    _
  // Predicated region
  $region42: #{fc_discriminator_forward.1} parent=0 // pred_check
    _
  $region43: #{fc_discriminator_forward.1} parent=0 // pred_check_branch
    %1970 = sbr.rel (0) target = $region45
  $region44: #{fc_discriminator_forward.1} parent=0 // pred_region
    _
  $region45: #{fc_discriminator_forward.1} parent=0 // pred_fallthru
    _

</llo_original>
